<compile_context>
chip_gen: v7x
topology: tpu7x:2x2x1
jax: 0.10.0
libtpu: 0.0.40
codegen_flags: <defaults>
</compile_context>

<pallas_src>
from functools import partial

import jax
import jax.numpy as jnp
from jax.experimental import pallas as pl
from jax.experimental.pallas import tpu as pltpu


def _round_up(n, m):
    return ((n + m - 1) // m) * m


def _rnn_classifier_kernel(ids_ref, emb_ref, wih_ref, brnn_ref, whh_ref,
                           wfc_ref, bfc_ref, o_ref, x_scr):
    """Whole forward pass in one kernel invocation.

    ids_ref : (B, T)    int32 token ids in SMEM
    emb_ref : (Vp, Dp)  f32 embedding table (zero-padded)
    wih_ref : (Dp, Hp)  f32 W_ih^T (zero-padded)
    brnn_ref: (1, Hp)   f32 b_ih + b_hh (zero-padded)
    whh_ref : (Hp, Hp)  bf16 W_hh^T (zero-padded)
    wfc_ref : (Hp, Cp)  f32 W_fc^T (zero-padded)
    bfc_ref : (1, Cp)   f32 b_fc, padded class lanes = -1e30
    o_ref   : (Bp, Cp)  f32 log-softmax output (lane-dense, unmasked store)
    x_scr   : (T*Bp, Dp) f32 VMEM scratch holding the gathered embeddings
    """
    B, T = ids_ref.shape
    TBp, Dp = x_scr.shape
    Bp = TBp // T

    # ---- fused embedding gather (token ids live in SMEM) ------------------
    # TODO(synk): no bounds check on token ids here (torch.nn.Embedding would
    # raise for out-of-range ids; an OOB id would read padded/garbage rows).
    x_scr[...] = jnp.zeros_like(x_scr)          # padded batch rows stay zero
    for t in range(T):
        for b in range(B):
            tok = ids_ref[b, t]
            x_scr[pl.ds(t * Bp + b, 1), :] = emb_ref[pl.ds(tok, 1), :]

    # ---- hoisted input projection for ALL timesteps (one MXU op, f32) -----
    x_proj = (jnp.dot(x_scr[...], wih_ref[...],
                      preferred_element_type=jnp.float32)
              + brnn_ref[...])                                # (T*Bp, Hp)

    # ---- relu RNN recurrence; h0 == 0 so step 0 skips its matmul ----------
    whh = whh_ref[...]                                        # (Hp, Hp) bf16
    h = jnp.maximum(x_proj[0:Bp, :], 0.0)                     # t = 0
    for t in range(1, T):
        pre = x_proj[t * Bp:(t + 1) * Bp, :] + jnp.dot(
            h.astype(jnp.bfloat16), whh,
            preferred_element_type=jnp.float32)
        h = jnp.maximum(pre, 0.0)
    # TODO(synk): pltpu.matmul_push_rhs(whh) once + matmul_acc_lhs/matmul_pop
    # per step would keep W_hh resident in the MXU across the unrolled loop.

    # ---- final linear + log-softmax (padded class lanes carry -1e30) ------
    logits = (jnp.dot(h, wfc_ref[...], preferred_element_type=jnp.float32)
              + bfc_ref[...])                                 # (Bp, Cp)
    m = jnp.max(logits, axis=1, keepdims=True)
    z = logits - m
    lse = jnp.log(jnp.sum(jnp.exp(z), axis=1, keepdims=True))
    o_ref[...] = z - lse


def prepare_params(params, *, lane=128, sublane=8):
    """One-time parameter preparation: fold biases, transpose, pad, cast.

    Done once (not per forward call) so the per-call path has zero weight
    re-layout ops / HBM traffic.
    """
    emb = params["embeddings"].astype(jnp.float32)               # (V, D)
    w_ih = params["w_ih"].astype(jnp.float32)                    # (H, D)
    w_hh = params["w_hh"].astype(jnp.float32)                    # (H, H)
    b_rnn = (params["b_ih"] + params["b_hh"]).astype(jnp.float32)
    w_fc = params["w_fc"].astype(jnp.float32)                    # (C, H)
    b_fc = params["b_fc"].astype(jnp.float32)                    # (C,)

    V, D = emb.shape
    H = w_ih.shape[0]
    C = w_fc.shape[0]
    Vp = _round_up(V, sublane)
    Dp = _round_up(D, lane)
    Hp = _round_up(H, lane)          # keep 128 (do NOT widen to 256)
    Cp = _round_up(C, lane)

    emb_p = jnp.pad(emb, ((0, Vp - V), (0, Dp - D)))             # (Vp, Dp)
    wih_t = jnp.pad(w_ih.T, ((0, Dp - D), (0, Hp - H)))          # (Dp, Hp)
    brnn_p = jnp.pad(b_rnn, (0, Hp - H)).reshape(1, Hp)          # (1, Hp)
    whh_t = jnp.pad(w_hh.T, ((0, Hp - H), (0, Hp - H))).astype(jnp.bfloat16)
    wfc_t = jnp.pad(w_fc.T, ((0, Hp - H), (0, Cp - C)))          # (Hp, Cp)
    # Padded class lanes get a huge negative bias so max/logsumexp ignore them.
    bfc_p = jnp.concatenate(
        [b_fc, jnp.full((Cp - C,), -1e30, jnp.float32)]).reshape(1, Cp)

    return {"emb": emb_p, "w_ih_t": wih_t, "b_rnn": brnn_p,
            "w_hh_t": whh_t, "w_fc_t": wfc_t, "b_fc": bfc_p}


@partial(jax.jit, static_argnames=("num_classes",))
def rnn_classifier_forward(token_ids, prepared, num_classes=5):
    """token_ids: int (B, T).  Returns log-probs (B, num_classes) float32."""
    B, T = token_ids.shape
    emb = prepared["emb"]          # (Vp, Dp) f32
    wih = prepared["w_ih_t"]       # (Dp, Hp) f32
    brnn = prepared["b_rnn"]       # (1, Hp)  f32
    whh = prepared["w_hh_t"]       # (Hp, Hp) bf16
    wfc = prepared["w_fc_t"]       # (Hp, Cp) f32
    bfc = prepared["b_fc"]         # (1, Cp)  f32

    Dp = emb.shape[1]
    Cp = wfc.shape[1]
    Bp = _round_up(max(B, 8), 8)   # pad batch to the f32 sublane granule

    vmem = pltpu.MemorySpace.VMEM
    smem = pltpu.MemorySpace.SMEM
    out = pl.pallas_call(
        _rnn_classifier_kernel,
        out_shape=jax.ShapeDtypeStruct((Bp, Cp), jnp.float32),
        in_specs=[
            pl.BlockSpec(memory_space=smem),   # token ids  (B, T)
            pl.BlockSpec(memory_space=vmem),   # embeddings (Vp, Dp)
            pl.BlockSpec(memory_space=vmem),   # W_ih^T     (Dp, Hp)
            pl.BlockSpec(memory_space=vmem),   # b_ih+b_hh  (1, Hp)
            pl.BlockSpec(memory_space=vmem),   # W_hh^T     (Hp, Hp) bf16
            pl.BlockSpec(memory_space=vmem),   # W_fc^T     (Hp, Cp)
            pl.BlockSpec(memory_space=vmem),   # b_fc       (1, Cp)
        ],
        out_specs=pl.BlockSpec(memory_space=vmem),
        scratch_shapes=[pltpu.VMEM((T * Bp, Dp), jnp.float32)],
    )(token_ids.astype(jnp.int32), emb, wih, brnn, whh, wfc, bfc)
    return out[:B, :num_classes]


def _reference_forward(token_ids, params):
    """Pure-JAX reference (mirrors the PyTorch module), exact f32 matmuls."""
    hi = jax.lax.Precision.HIGHEST
    emb = params["embeddings"].astype(jnp.float32)
    w_ih, w_hh = params["w_ih"], params["w_hh"]
    b_ih, b_hh = params["b_ih"], params["b_hh"]
    w_fc, b_fc = params["w_fc"], params["b_fc"]
    B, T = token_ids.shape
    H = w_ih.shape[0]
    x = jnp.take(emb, token_ids, axis=0)                          # (B, T, D)
    h = jnp.zeros((B, H), jnp.float32)
    for t in range(T):
        h = jax.nn.relu(jnp.dot(x[:, t], w_ih.T, precision=hi) + b_ih
                        + jnp.dot(h, w_hh.T, precision=hi) + b_hh)
    logits = jnp.dot(h, w_fc.T, precision=hi) + b_fc
    return jax.nn.log_softmax(logits, axis=1)


def init_params(key, vocab_size, embed_dim, hidden_size, num_classes):
    """Deterministic synthetic parameters matching the PyTorch module's shapes."""
    ks = jax.random.split(key, 7)
    k_scale = 1.0 / jnp.sqrt(hidden_size)
    return {
        "embeddings": jax.random.normal(ks[0], (vocab_size, embed_dim), jnp.float32),
        "w_ih": jax.random.uniform(ks[1], (hidden_size, embed_dim), jnp.float32,
                                   -k_scale, k_scale),
        "w_hh": jax.random.uniform(ks[2], (hidden_size, hidden_size), jnp.float32,
                                   -k_scale, k_scale),
        "b_ih": jax.random.uniform(ks[3], (hidden_size,), jnp.float32,
                                   -k_scale, k_scale),
        "b_hh": jax.random.uniform(ks[4], (hidden_size,), jnp.float32,
                                   -k_scale, k_scale),
        "w_fc": jax.random.uniform(ks[5], (num_classes, hidden_size), jnp.float32,
                                   -k_scale, k_scale),
        "b_fc": jax.random.uniform(ks[6], (num_classes,), jnp.float32,
                                   -k_scale, k_scale),
    }


if __name__ == "__main__":
    B, T = 2, 8
    VOCAB, D, H, C = 50, 300, 32, 5  # num_layers = 1

    key = jax.random.PRNGKey(0)
    k_par, k_tok = jax.random.split(key)
    params = init_params(k_par, VOCAB, D, H, C)
    token_ids = jax.random.randint(k_tok, (B, T), 0, VOCAB, dtype=jnp.int32)

    prepared = prepare_params(params)                 # one-time weight prep
    log_probs = rnn_classifier_forward(token_ids, prepared, num_classes=C)
    jax.block_until_ready(log_probs)

    assert log_probs.shape == (B, C)
    assert log_probs.dtype == jnp.float32
    # log-softmax rows should exponentiate-sum to 1
    assert jnp.allclose(jnp.sum(jnp.exp(log_probs), axis=1), 1.0, atol=1e-4)
    # Match the exact-f32 reference of the PyTorch forward.  The recurrence
    # matmul uses bf16 MXU operands (per perf review), so the tolerance is
    # loosened from 1e-4 to 3e-2; observed drift is well inside that.
    ref = _reference_forward(token_ids, params)
    max_diff = float(jnp.max(jnp.abs(log_probs - ref)))
    assert jnp.allclose(log_probs, ref, atol=3e-2, rtol=3e-2), max_diff

    print("KERNEL_OK")
</pallas_src>

<mosaic_0001>
module attributes {stable_mosaic.version = 11 : i64} {
  func.func @_rnn_classifier_kernel(%arg0: memref<2x8xi32, #tpu.memory_space<smem>>, %arg1: memref<56x384xf32, #tpu.memory_space<vmem>>, %arg2: memref<384x128xf32, #tpu.memory_space<vmem>>, %arg3: memref<1x128xf32, #tpu.memory_space<vmem>>, %arg4: memref<128x128xbf16, #tpu.memory_space<vmem>>, %arg5: memref<128x128xf32, #tpu.memory_space<vmem>>, %arg6: memref<1x128xf32, #tpu.memory_space<vmem>>, %arg7: memref<8x128xf32, #tpu.memory_space<vmem>>, %arg8: memref<64x384xf32, #tpu.memory_space<vmem>>) attributes {dimension_semantics = [], scalar_prefetch = 0 : i64, scratch_operands = 1 : i64, tpu.core_type = #tpu.core_type<tc>} {
    %cst = arith.constant 0.000000e+00 : f32
    %0 = vector.broadcast %cst : f32 to vector<64x384xf32>
    %c0 = arith.constant 0 : index
    %c0_0 = arith.constant 0 : index
    %1 = vector.load %arg8[%c0, %c0_0] : memref<64x384xf32, #tpu.memory_space<vmem>>, vector<64x384xf32>
    tpu.vector_store %arg8[%c0, %c0_0], %0 {strides = array<i32>} : memref<64x384xf32, #tpu.memory_space<vmem>>, vector<64x384xf32>,
    %c0_1 = arith.constant 0 : index
    %c0_2 = arith.constant 0 : index
    %2 = memref.load %arg0[%c0_1, %c0_2] : memref<2x8xi32, #tpu.memory_space<smem>>
    %3 = arith.index_cast %2 : i32 to index
    %c0_3 = arith.constant 0 : index
    %4 = vector.load %arg1[%3, %c0_3] : memref<56x384xf32, #tpu.memory_space<vmem>>, vector<1x384xf32>
    %c0_4 = arith.constant 0 : index
    %c0_5 = arith.constant 0 : index
    %5 = vector.load %arg8[%c0_4, %c0_5] : memref<64x384xf32, #tpu.memory_space<vmem>>, vector<1x384xf32>
    tpu.vector_store %arg8[%c0_4, %c0_5], %4 {strides = array<i32>} : memref<64x384xf32, #tpu.memory_space<vmem>>, vector<1x384xf32>,
    %c1 = arith.constant 1 : index
    %c0_6 = arith.constant 0 : index
    %6 = memref.load %arg0[%c1, %c0_6] : memref<2x8xi32, #tpu.memory_space<smem>>
    %7 = arith.index_cast %6 : i32 to index
    %c0_7 = arith.constant 0 : index
    %8 = vector.load %arg1[%7, %c0_7] : memref<56x384xf32, #tpu.memory_space<vmem>>, vector<1x384xf32>
    %c1_8 = arith.constant 1 : index
    %c0_9 = arith.constant 0 : index
    %9 = vector.load %arg8[%c1_8, %c0_9] : memref<64x384xf32, #tpu.memory_space<vmem>>, vector<1x384xf32>
    tpu.vector_store %arg8[%c1_8, %c0_9], %8 {strides = array<i32>} : memref<64x384xf32, #tpu.memory_space<vmem>>, vector<1x384xf32>,
    %c0_10 = arith.constant 0 : index
    %c1_11 = arith.constant 1 : index
    %10 = memref.load %arg0[%c0_10, %c1_11] : memref<2x8xi32, #tpu.memory_space<smem>>
    %11 = arith.index_cast %10 : i32 to index
    %c0_12 = arith.constant 0 : index
    %12 = vector.load %arg1[%11, %c0_12] : memref<56x384xf32, #tpu.memory_space<vmem>>, vector<1x384xf32>
    %c8 = arith.constant 8 : index
    %c0_13 = arith.constant 0 : index
    %13 = vector.load %arg8[%c8, %c0_13] : memref<64x384xf32, #tpu.memory_space<vmem>>, vector<1x384xf32>
    tpu.vector_store %arg8[%c8, %c0_13], %12 {strides = array<i32>} : memref<64x384xf32, #tpu.memory_space<vmem>>, vector<1x384xf32>,
    %c1_14 = arith.constant 1 : index
    %c1_15 = arith.constant 1 : index
    %14 = memref.load %arg0[%c1_14, %c1_15] : memref<2x8xi32, #tpu.memory_space<smem>>
    %15 = arith.index_cast %14 : i32 to index
    %c0_16 = arith.constant 0 : index
    %16 = vector.load %arg1[%15, %c0_16] : memref<56x384xf32, #tpu.memory_space<vmem>>, vector<1x384xf32>
    %c9 = arith.constant 9 : index
    %c0_17 = arith.constant 0 : index
    %17 = vector.load %arg8[%c9, %c0_17] : memref<64x384xf32, #tpu.memory_space<vmem>>, vector<1x384xf32>
    tpu.vector_store %arg8[%c9, %c0_17], %16 {strides = array<i32>} : memref<64x384xf32, #tpu.memory_space<vmem>>, vector<1x384xf32>,
    %c0_18 = arith.constant 0 : index
    %c2 = arith.constant 2 : index
    %18 = memref.load %arg0[%c0_18, %c2] : memref<2x8xi32, #tpu.memory_space<smem>>
    %19 = arith.index_cast %18 : i32 to index
    %c0_19 = arith.constant 0 : index
    %20 = vector.load %arg1[%19, %c0_19] : memref<56x384xf32, #tpu.memory_space<vmem>>, vector<1x384xf32>
    %c16 = arith.constant 16 : index
    %c0_20 = arith.constant 0 : index
    %21 = vector.load %arg8[%c16, %c0_20] : memref<64x384xf32, #tpu.memory_space<vmem>>, vector<1x384xf32>
    tpu.vector_store %arg8[%c16, %c0_20], %20 {strides = array<i32>} : memref<64x384xf32, #tpu.memory_space<vmem>>, vector<1x384xf32>,
    %c1_21 = arith.constant 1 : index
    %c2_22 = arith.constant 2 : index
    %22 = memref.load %arg0[%c1_21, %c2_22] : memref<2x8xi32, #tpu.memory_space<smem>>
    %23 = arith.index_cast %22 : i32 to index
    %c0_23 = arith.constant 0 : index
    %24 = vector.load %arg1[%23, %c0_23] : memref<56x384xf32, #tpu.memory_space<vmem>>, vector<1x384xf32>
    %c17 = arith.constant 17 : index
    %c0_24 = arith.constant 0 : index
    %25 = vector.load %arg8[%c17, %c0_24] : memref<64x384xf32, #tpu.memory_space<vmem>>, vector<1x384xf32>
    tpu.vector_store %arg8[%c17, %c0_24], %24 {strides = array<i32>} : memref<64x384xf32, #tpu.memory_space<vmem>>, vector<1x384xf32>,
    %c0_25 = arith.constant 0 : index
    %c3 = arith.constant 3 : index
    %26 = memref.load %arg0[%c0_25, %c3] : memref<2x8xi32, #tpu.memory_space<smem>>
    %27 = arith.index_cast %26 : i32 to index
    %c0_26 = arith.constant 0 : index
    %28 = vector.load %arg1[%27, %c0_26] : memref<56x384xf32, #tpu.memory_space<vmem>>, vector<1x384xf32>
    %c24 = arith.constant 24 : index
    %c0_27 = arith.constant 0 : index
    %29 = vector.load %arg8[%c24, %c0_27] : memref<64x384xf32, #tpu.memory_space<vmem>>, vector<1x384xf32>
    tpu.vector_store %arg8[%c24, %c0_27], %28 {strides = array<i32>} : memref<64x384xf32, #tpu.memory_space<vmem>>, vector<1x384xf32>,
    %c1_28 = arith.constant 1 : index
    %c3_29 = arith.constant 3 : index
    %30 = memref.load %arg0[%c1_28, %c3_29] : memref<2x8xi32, #tpu.memory_space<smem>>
    %31 = arith.index_cast %30 : i32 to index
    %c0_30 = arith.constant 0 : index
    %32 = vector.load %arg1[%31, %c0_30] : memref<56x384xf32, #tpu.memory_space<vmem>>, vector<1x384xf32>
    %c25 = arith.constant 25 : index
    %c0_31 = arith.constant 0 : index
    %33 = vector.load %arg8[%c25, %c0_31] : memref<64x384xf32, #tpu.memory_space<vmem>>, vector<1x384xf32>
    tpu.vector_store %arg8[%c25, %c0_31], %32 {strides = array<i32>} : memref<64x384xf32, #tpu.memory_space<vmem>>, vector<1x384xf32>,
    %c0_32 = arith.constant 0 : index
    %c4 = arith.constant 4 : index
    %34 = memref.load %arg0[%c0_32, %c4] : memref<2x8xi32, #tpu.memory_space<smem>>
    %35 = arith.index_cast %34 : i32 to index
    %c0_33 = arith.constant 0 : index
    %36 = vector.load %arg1[%35, %c0_33] : memref<56x384xf32, #tpu.memory_space<vmem>>, vector<1x384xf32>
    %c32 = arith.constant 32 : index
    %c0_34 = arith.constant 0 : index
    %37 = vector.load %arg8[%c32, %c0_34] : memref<64x384xf32, #tpu.memory_space<vmem>>, vector<1x384xf32>
    tpu.vector_store %arg8[%c32, %c0_34], %36 {strides = array<i32>} : memref<64x384xf32, #tpu.memory_space<vmem>>, vector<1x384xf32>,
    %c1_35 = arith.constant 1 : index
    %c4_36 = arith.constant 4 : index
    %38 = memref.load %arg0[%c1_35, %c4_36] : memref<2x8xi32, #tpu.memory_space<smem>>
    %39 = arith.index_cast %38 : i32 to index
    %c0_37 = arith.constant 0 : index
    %40 = vector.load %arg1[%39, %c0_37] : memref<56x384xf32, #tpu.memory_space<vmem>>, vector<1x384xf32>
    %c33 = arith.constant 33 : index
    %c0_38 = arith.constant 0 : index
    %41 = vector.load %arg8[%c33, %c0_38] : memref<64x384xf32, #tpu.memory_space<vmem>>, vector<1x384xf32>
    tpu.vector_store %arg8[%c33, %c0_38], %40 {strides = array<i32>} : memref<64x384xf32, #tpu.memory_space<vmem>>, vector<1x384xf32>,
    %c0_39 = arith.constant 0 : index
    %c5 = arith.constant 5 : index
    %42 = memref.load %arg0[%c0_39, %c5] : memref<2x8xi32, #tpu.memory_space<smem>>
    %43 = arith.index_cast %42 : i32 to index
    %c0_40 = arith.constant 0 : index
    %44 = vector.load %arg1[%43, %c0_40] : memref<56x384xf32, #tpu.memory_space<vmem>>, vector<1x384xf32>
    %c40 = arith.constant 40 : index
    %c0_41 = arith.constant 0 : index
    %45 = vector.load %arg8[%c40, %c0_41] : memref<64x384xf32, #tpu.memory_space<vmem>>, vector<1x384xf32>
    tpu.vector_store %arg8[%c40, %c0_41], %44 {strides = array<i32>} : memref<64x384xf32, #tpu.memory_space<vmem>>, vector<1x384xf32>,
    %c1_42 = arith.constant 1 : index
    %c5_43 = arith.constant 5 : index
    %46 = memref.load %arg0[%c1_42, %c5_43] : memref<2x8xi32, #tpu.memory_space<smem>>
    %47 = arith.index_cast %46 : i32 to index
    %c0_44 = arith.constant 0 : index
    %48 = vector.load %arg1[%47, %c0_44] : memref<56x384xf32, #tpu.memory_space<vmem>>, vector<1x384xf32>
    %c41 = arith.constant 41 : index
    %c0_45 = arith.constant 0 : index
    %49 = vector.load %arg8[%c41, %c0_45] : memref<64x384xf32, #tpu.memory_space<vmem>>, vector<1x384xf32>
    tpu.vector_store %arg8[%c41, %c0_45], %48 {strides = array<i32>} : memref<64x384xf32, #tpu.memory_space<vmem>>, vector<1x384xf32>,
    %c0_46 = arith.constant 0 : index
    %c6 = arith.constant 6 : index
    %50 = memref.load %arg0[%c0_46, %c6] : memref<2x8xi32, #tpu.memory_space<smem>>
    %51 = arith.index_cast %50 : i32 to index
    %c0_47 = arith.constant 0 : index
    %52 = vector.load %arg1[%51, %c0_47] : memref<56x384xf32, #tpu.memory_space<vmem>>, vector<1x384xf32>
    %c48 = arith.constant 48 : index
    %c0_48 = arith.constant 0 : index
    %53 = vector.load %arg8[%c48, %c0_48] : memref<64x384xf32, #tpu.memory_space<vmem>>, vector<1x384xf32>
    tpu.vector_store %arg8[%c48, %c0_48], %52 {strides = array<i32>} : memref<64x384xf32, #tpu.memory_space<vmem>>, vector<1x384xf32>,
    %c1_49 = arith.constant 1 : index
    %c6_50 = arith.constant 6 : index
    %54 = memref.load %arg0[%c1_49, %c6_50] : memref<2x8xi32, #tpu.memory_space<smem>>
    %55 = arith.index_cast %54 : i32 to index
    %c0_51 = arith.constant 0 : index
    %56 = vector.load %arg1[%55, %c0_51] : memref<56x384xf32, #tpu.memory_space<vmem>>, vector<1x384xf32>
    %c49 = arith.constant 49 : index
    %c0_52 = arith.constant 0 : index
    %57 = vector.load %arg8[%c49, %c0_52] : memref<64x384xf32, #tpu.memory_space<vmem>>, vector<1x384xf32>
    tpu.vector_store %arg8[%c49, %c0_52], %56 {strides = array<i32>} : memref<64x384xf32, #tpu.memory_space<vmem>>, vector<1x384xf32>,
    %c0_53 = arith.constant 0 : index
    %c7 = arith.constant 7 : index
    %58 = memref.load %arg0[%c0_53, %c7] : memref<2x8xi32, #tpu.memory_space<smem>>
    %59 = arith.index_cast %58 : i32 to index
    %c0_54 = arith.constant 0 : index
    %60 = vector.load %arg1[%59, %c0_54] : memref<56x384xf32, #tpu.memory_space<vmem>>, vector<1x384xf32>
    %c56 = arith.constant 56 : index
    %c0_55 = arith.constant 0 : index
    %61 = vector.load %arg8[%c56, %c0_55] : memref<64x384xf32, #tpu.memory_space<vmem>>, vector<1x384xf32>
    tpu.vector_store %arg8[%c56, %c0_55], %60 {strides = array<i32>} : memref<64x384xf32, #tpu.memory_space<vmem>>, vector<1x384xf32>,
    %c1_56 = arith.constant 1 : index
    %c7_57 = arith.constant 7 : index
    %62 = memref.load %arg0[%c1_56, %c7_57] : memref<2x8xi32, #tpu.memory_space<smem>>
    %63 = arith.index_cast %62 : i32 to index
    %c0_58 = arith.constant 0 : index
    %64 = vector.load %arg1[%63, %c0_58] : memref<56x384xf32, #tpu.memory_space<vmem>>, vector<1x384xf32>
    %c57 = arith.constant 57 : index
    %c0_59 = arith.constant 0 : index
    %65 = vector.load %arg8[%c57, %c0_59] : memref<64x384xf32, #tpu.memory_space<vmem>>, vector<1x384xf32>
    tpu.vector_store %arg8[%c57, %c0_59], %64 {strides = array<i32>} : memref<64x384xf32, #tpu.memory_space<vmem>>, vector<1x384xf32>,
    %c0_60 = arith.constant 0 : index
    %c0_61 = arith.constant 0 : index
    %66 = vector.load %arg8[%c0_60, %c0_61] : memref<64x384xf32, #tpu.memory_space<vmem>>, vector<64x384xf32>
    %c0_62 = arith.constant 0 : index
    %c0_63 = arith.constant 0 : index
    %67 = vector.load %arg2[%c0_62, %c0_63] : memref<384x128xf32, #tpu.memory_space<vmem>>, vector<384x128xf32>
    %cst_64 = arith.constant dense<0.000000e+00> : vector<64x128xf32>
    %68 = tpu.matmul %66, %67, %cst_64 {dimension_numbers = #tpu.dot_dimension_numbers<[1], [0], [0], [1], [0, 0, 1, 1], [], []>} : vector<64x384xf32>, vector<384x128xf32>, vector<64x128xf32> -> vector<64x128xf32>
    %c0_65 = arith.constant 0 : index
    %c0_66 = arith.constant 0 : index
    %69 = vector.load %arg3[%c0_65, %c0_66] : memref<1x128xf32, #tpu.memory_space<vmem>>, vector<1x128xf32>
    %70 = vector.broadcast %69 : vector<1x128xf32> to vector<64x128xf32>
    %71 = arith.addf %68, %70 : vector<64x128xf32>
    %c0_67 = arith.constant 0 : index
    %c0_68 = arith.constant 0 : index
    %72 = vector.load %arg4[%c0_67, %c0_68] : memref<128x128xbf16, #tpu.memory_space<vmem>>, vector<128x128xbf16>
    %73 = vector.extract_strided_slice %71 {offsets = [0, 0], sizes = [8, 128], strides = [1, 1]} : vector<64x128xf32> to vector<8x128xf32>
    %cst_69 = arith.constant 0.000000e+00 : f32
    %74 = vector.broadcast %cst_69 : f32 to vector<8x128xf32>
    %75 = arith.maximumf %73, %74 : vector<8x128xf32>
    %76 = vector.extract_strided_slice %71 {offsets = [8, 0], sizes = [8, 128], strides = [1, 1]} : vector<64x128xf32> to vector<8x128xf32>
    %77 = arith.truncf %75 : vector<8x128xf32> to vector<8x128xbf16>
    %cst_70 = arith.constant dense<0.000000e+00> : vector<8x128xf32>
    %78 = tpu.matmul %77, %72, %cst_70 {dimension_numbers = #tpu.dot_dimension_numbers<[1], [0], [0], [1], [0, 0, 1, 1], [], []>} : vector<8x128xbf16>, vector<128x128xbf16>, vector<8x128xf32> -> vector<8x128xf32>
    %79 = arith.addf %76, %78 : vector<8x128xf32>
    %cst_71 = arith.constant 0.000000e+00 : f32
    %80 = vector.broadcast %cst_71 : f32 to vector<8x128xf32>
    %81 = arith.maximumf %79, %80 : vector<8x128xf32>
    %82 = vector.extract_strided_slice %71 {offsets = [16, 0], sizes = [8, 128], strides = [1, 1]} : vector<64x128xf32> to vector<8x128xf32>
    %83 = arith.truncf %81 : vector<8x128xf32> to vector<8x128xbf16>
    %cst_72 = arith.constant dense<0.000000e+00> : vector<8x128xf32>
    %84 = tpu.matmul %83, %72, %cst_72 {dimension_numbers = #tpu.dot_dimension_numbers<[1], [0], [0], [1], [0, 0, 1, 1], [], []>} : vector<8x128xbf16>, vector<128x128xbf16>, vector<8x128xf32> -> vector<8x128xf32>
    %85 = arith.addf %82, %84 : vector<8x128xf32>
    %cst_73 = arith.constant 0.000000e+00 : f32
    %86 = vector.broadcast %cst_73 : f32 to vector<8x128xf32>
    %87 = arith.maximumf %85, %86 : vector<8x128xf32>
    %88 = vector.extract_strided_slice %71 {offsets = [24, 0], sizes = [8, 128], strides = [1, 1]} : vector<64x128xf32> to vector<8x128xf32>
    %89 = arith.truncf %87 : vector<8x128xf32> to vector<8x128xbf16>
    %cst_74 = arith.constant dense<0.000000e+00> : vector<8x128xf32>
    %90 = tpu.matmul %89, %72, %cst_74 {dimension_numbers = #tpu.dot_dimension_numbers<[1], [0], [0], [1], [0, 0, 1, 1], [], []>} : vector<8x128xbf16>, vector<128x128xbf16>, vector<8x128xf32> -> vector<8x128xf32>
    %91 = arith.addf %88, %90 : vector<8x128xf32>
    %cst_75 = arith.constant 0.000000e+00 : f32
    %92 = vector.broadcast %cst_75 : f32 to vector<8x128xf32>
    %93 = arith.maximumf %91, %92 : vector<8x128xf32>
    %94 = vector.extract_strided_slice %71 {offsets = [32, 0], sizes = [8, 128], strides = [1, 1]} : vector<64x128xf32> to vector<8x128xf32>
    %95 = arith.truncf %93 : vector<8x128xf32> to vector<8x128xbf16>
    %cst_76 = arith.constant dense<0.000000e+00> : vector<8x128xf32>
    %96 = tpu.matmul %95, %72, %cst_76 {dimension_numbers = #tpu.dot_dimension_numbers<[1], [0], [0], [1], [0, 0, 1, 1], [], []>} : vector<8x128xbf16>, vector<128x128xbf16>, vector<8x128xf32> -> vector<8x128xf32>
    %97 = arith.addf %94, %96 : vector<8x128xf32>
    %cst_77 = arith.constant 0.000000e+00 : f32
    %98 = vector.broadcast %cst_77 : f32 to vector<8x128xf32>
    %99 = arith.maximumf %97, %98 : vector<8x128xf32>
    %100 = vector.extract_strided_slice %71 {offsets = [40, 0], sizes = [8, 128], strides = [1, 1]} : vector<64x128xf32> to vector<8x128xf32>
    %101 = arith.truncf %99 : vector<8x128xf32> to vector<8x128xbf16>
    %cst_78 = arith.constant dense<0.000000e+00> : vector<8x128xf32>
    %102 = tpu.matmul %101, %72, %cst_78 {dimension_numbers = #tpu.dot_dimension_numbers<[1], [0], [0], [1], [0, 0, 1, 1], [], []>} : vector<8x128xbf16>, vector<128x128xbf16>, vector<8x128xf32> -> vector<8x128xf32>
    %103 = arith.addf %100, %102 : vector<8x128xf32>
    %cst_79 = arith.constant 0.000000e+00 : f32
    %104 = vector.broadcast %cst_79 : f32 to vector<8x128xf32>
    %105 = arith.maximumf %103, %104 : vector<8x128xf32>
    %106 = vector.extract_strided_slice %71 {offsets = [48, 0], sizes = [8, 128], strides = [1, 1]} : vector<64x128xf32> to vector<8x128xf32>
    %107 = arith.truncf %105 : vector<8x128xf32> to vector<8x128xbf16>
    %cst_80 = arith.constant dense<0.000000e+00> : vector<8x128xf32>
    %108 = tpu.matmul %107, %72, %cst_80 {dimension_numbers = #tpu.dot_dimension_numbers<[1], [0], [0], [1], [0, 0, 1, 1], [], []>} : vector<8x128xbf16>, vector<128x128xbf16>, vector<8x128xf32> -> vector<8x128xf32>
    %109 = arith.addf %106, %108 : vector<8x128xf32>
    %cst_81 = arith.constant 0.000000e+00 : f32
    %110 = vector.broadcast %cst_81 : f32 to vector<8x128xf32>
    %111 = arith.maximumf %109, %110 : vector<8x128xf32>
    %112 = vector.extract_strided_slice %71 {offsets = [56, 0], sizes = [8, 128], strides = [1, 1]} : vector<64x128xf32> to vector<8x128xf32>
    %113 = arith.truncf %111 : vector<8x128xf32> to vector<8x128xbf16>
    %cst_82 = arith.constant dense<0.000000e+00> : vector<8x128xf32>
    %114 = tpu.matmul %113, %72, %cst_82 {dimension_numbers = #tpu.dot_dimension_numbers<[1], [0], [0], [1], [0, 0, 1, 1], [], []>} : vector<8x128xbf16>, vector<128x128xbf16>, vector<8x128xf32> -> vector<8x128xf32>
    %115 = arith.addf %112, %114 : vector<8x128xf32>
    %cst_83 = arith.constant 0.000000e+00 : f32
    %116 = vector.broadcast %cst_83 : f32 to vector<8x128xf32>
    %117 = arith.maximumf %115, %116 : vector<8x128xf32>
    %c0_84 = arith.constant 0 : index
    %c0_85 = arith.constant 0 : index
    %118 = vector.load %arg5[%c0_84, %c0_85] : memref<128x128xf32, #tpu.memory_space<vmem>>, vector<128x128xf32>
    %cst_86 = arith.constant dense<0.000000e+00> : vector<8x128xf32>
    %119 = tpu.matmul %117, %118, %cst_86 {dimension_numbers = #tpu.dot_dimension_numbers<[1], [0], [0], [1], [0, 0, 1, 1], [], []>} : vector<8x128xf32>, vector<128x128xf32>, vector<8x128xf32> -> vector<8x128xf32>
    %c0_87 = arith.constant 0 : index
    %c0_88 = arith.constant 0 : index
    %120 = vector.load %arg6[%c0_87, %c0_88] : memref<1x128xf32, #tpu.memory_space<vmem>>, vector<1x128xf32>
    %121 = vector.broadcast %120 : vector<1x128xf32> to vector<8x128xf32>
    %122 = arith.addf %119, %121 : vector<8x128xf32>
    %cst_89 = arith.constant dense<0xFF800000> : vector<8xf32>
    %123 = vector.multi_reduction <maximumf>, %122, %cst_89 [1] : vector<8x128xf32> to vector<8xf32>
    %124 = vector.shape_cast %123 : vector<8xf32> to vector<8x1xf32>
    %125 = vector.broadcast %124 : vector<8x1xf32> to vector<8x128xf32>
    %126 = arith.subf %122, %125 : vector<8x128xf32>
    %127 = math.exp %126 : vector<8x128xf32>
    %cst_90 = arith.constant dense<0.000000e+00> : vector<8xf32>
    %128 = vector.multi_reduction <add>, %127, %cst_90 [1] : vector<8x128xf32> to vector<8xf32>
    %129 = vector.shape_cast %128 : vector<8xf32> to vector<8x1xf32>
    %130 = math.log %129 : vector<8x1xf32>
    %131 = vector.broadcast %130 : vector<8x1xf32> to vector<8x128xf32>
    %132 = arith.subf %126, %131 : vector<8x128xf32>
    %c0_91 = arith.constant 0 : index
    %c0_92 = arith.constant 0 : index
    %133 = vector.load %arg7[%c0_91, %c0_92] : memref<8x128xf32, #tpu.memory_space<vmem>>, vector<8x128xf32>
    tpu.vector_store %arg7[%c0_91, %c0_92], %132 {strides = array<i32>} : memref<8x128xf32, #tpu.memory_space<vmem>>, vector<8x128xf32>,
    return
  }
}

</mosaic_0001>

<llo_original>
// kernel: rnn_classifier_forward.1
$region0: #{rnn_classifier_forward.1}
  #allocation0 [shape = 'u32[]', space=smem, size = 0x4, offset = 0x4, fixed_abs, tag = 'smem constant byte address 0x4 - core index']
  #allocation1 [shape = 'u32[144,128]{1,0:T(1,128)}', space=vmem, size = 0x12000, scoped, tag = 'internal scratch']
  #allocation2 [shape = 'f32[64,384]{1,0:T(8,128)}', space=vmem, size = 0x18000, scoped, tag = 'scratch operand']
  %s0 = inlined_call_operand.hbm [shape: s32[2,8], index: 0, kind: input, shape index: {}]
  %s1 = inlined_call_operand.hbm [shape: f32[56,384], index: 1, kind: input, shape index: {}]
  %s2 = inlined_call_operand.hbm [shape: f32[384,128], index: 2, kind: input, shape index: {}]
  %s3 = inlined_call_operand.vmem [shape: f32[1,128], index: 3, kind: input, shape index: {}]
  %s4 = inlined_call_operand.hbm [shape: bf16[128,128], index: 4, kind: input, shape index: {}]
  %s5 = inlined_call_operand.hbm [shape: f32[128,128], index: 5, kind: input, shape index: {}]
  %s6 = inlined_call_operand.vmem [shape: f32[1,128], index: 6, kind: input, shape index: {}]
  %s7 = inlined_call_operand.vmem [shape: f32[8,128], index: 7, kind: output, shape index: {}]
  %s8 = sld [smem:[#allocation0]]
  $region58: #{rnn_classifier_forward.1} parent=0
    _
  %s10 = ssub.s32 1, %s8
  %s11 = scalar_select 0, %s10, %s8
  $region1: #{rnn_classifier_forward.1} parent=0
    #allocation3 [shape = 'u8[1024]{0}', space=smem, size = 0x400, scoped, tag = 'input window, operand 0, single buffered']
    #allocation4 [shape = 's32[1]{0}', space=sflag, size = 0x4, scoped, tag = 'scoped memory for rnn_classifier_forward.1']
    #allocation5 [shape = 's32[1]{0}', space=sflag, size = 0x4, scoped, tag = 'scoped memory for rnn_classifier_forward.1']
    #allocation6 [shape = 'u8[86016]{0}', space=vmem, size = 0x15000, scoped, tag = 'input window, operand 1, single buffered']
    #allocation7 [shape = 'u8[196608]{0}', space=vmem, size = 0x30000, scoped, tag = 'input window, operand 2, single buffered']
    #allocation8 [shape = 's32[1]{0}', space=sflag, size = 0x4, scoped, tag = 'scoped memory for rnn_classifier_forward.1']
    #allocation9 [shape = 'u8[32768]{0}', space=vmem, size = 0x8000, scoped, tag = 'input window, operand 4, single buffered']
    #allocation10 [shape = 'u8[65536]{0}', space=vmem, size = 0x10000, scoped, tag = 'input window, operand 5, single buffered']
    #allocation11 [shape = 's32[1]{0}', space=sflag, size = 0x4, scoped, tag = 'scoped memory for rnn_classifier_forward.1']
    %12 = vsyncpa [#allocation5], 0
    %13 = vsyncpa [#allocation4], 0
    %14 = vsyncpa [#allocation8], 0
    %15 = vsyncpa [#allocation11], 0
    // Predicated region
    $region2: #{rnn_classifier_forward.1} parent=1 // pred_check
      _
    $region3: #{rnn_classifier_forward.1} parent=1 // pred_check_branch
      %17 = sbr.rel (0) target = $region5
    $region4: #{rnn_classifier_forward.1} parent=1 // pred_region
      %s19 = ssub.s32 32, 32
      %20 = vsyncadd [#allocation5], %s19
      %23 = dma.hbm_to_smem %s0, 32, [#allocation3], [#allocation5]
    $region5: #{rnn_classifier_forward.1} parent=1 // pred_fallthru
      _
    // Predicated region
    $region6: #{rnn_classifier_forward.1} parent=1 // pred_check
      _
    $region7: #{rnn_classifier_forward.1} parent=1 // pred_check_branch
      %25 = sbr.rel (0) target = $region9
    $region8: #{rnn_classifier_forward.1} parent=1 // pred_region
      %s27 = ssub.s32 2688, 2688
      %28 = vsyncadd [#allocation4], %s27
      %s29 = sshll.u32 [#allocation6], 4
      %s30 = int_to_ptr.vmem [resolvable:$true] %s29
      %35 = dma.hbm_to_vmem [thread:$0]  %s1, 2688, %s30, [#allocation4], 384, 384, 24
    $region9: #{rnn_classifier_forward.1} parent=1 // pred_fallthru
      _
    // Predicated region
    $region10: #{rnn_classifier_forward.1} parent=1 // pred_check
      _
    $region11: #{rnn_classifier_forward.1} parent=1 // pred_check_branch
      %37 = sbr.rel (0) target = $region13
    $region12: #{rnn_classifier_forward.1} parent=1 // pred_region
      %s39 = ssub.s32 6144, 6144
      %40 = vsyncadd [#allocation8], %s39
      %s41 = sshll.u32 [#allocation7], 4
      %s42 = int_to_ptr.vmem [resolvable:$true] %s41
      %47 = dma.hbm_to_vmem [thread:$0]  %s2, 6144, %s42, [#allocation8], 128, 128, 8
    $region13: #{rnn_classifier_forward.1} parent=1 // pred_fallthru
      _
    // Predicated region
    $region14: #{rnn_classifier_forward.1} parent=1 // pred_check
      _
    $region15: #{rnn_classifier_forward.1} parent=1 // pred_check_branch
      %49 = sbr.rel (0) target = $region17
    $region16: #{rnn_classifier_forward.1} parent=1 // pred_region
      _
    $region17: #{rnn_classifier_forward.1} parent=1 // pred_fallthru
      _
    // Predicated region
    $region18: #{rnn_classifier_forward.1} parent=1 // pred_check
      _
    $region19: #{rnn_classifier_forward.1} parent=1 // pred_check_branch
      %51 = sbr.rel (0) target = $region21
    $region20: #{rnn_classifier_forward.1} parent=1 // pred_region
      %s53 = ssub.s32 1024, 1024
      %54 = vsyncadd [#allocation8], %s53
      %s55 = sshll.u32 [#allocation9], 4
      %s56 = int_to_ptr.vmem [resolvable:$true] %s55
      %61 = dma.hbm_to_vmem [thread:$0]  %s4, 1024, %s56, [#allocation8], 64, 64, 4
    $region21: #{rnn_classifier_forward.1} parent=1 // pred_fallthru
      _
    // Predicated region
    $region22: #{rnn_classifier_forward.1} parent=1 // pred_check
      _
    $region23: #{rnn_classifier_forward.1} parent=1 // pred_check_branch
      %63 = sbr.rel (0) target = $region25
    $region24: #{rnn_classifier_forward.1} parent=1 // pred_region
      %s65 = ssub.s32 2048, 2048
      %66 = vsyncadd [#allocation11], %s65
      %s67 = sshll.u32 [#allocation10], 4
      %s68 = int_to_ptr.vmem [resolvable:$true] %s67
      %73 = dma.hbm_to_vmem [thread:$0]  %s5, 2048, %s68, [#allocation11], 128, 128, 8
    $region25: #{rnn_classifier_forward.1} parent=1 // pred_fallthru
      _
    // Predicated region
    $region26: #{rnn_classifier_forward.1} parent=1 // pred_check
      _
    $region27: #{rnn_classifier_forward.1} parent=1 // pred_check_branch
      %75 = sbr.rel (0) target = $region29
    $region28: #{rnn_classifier_forward.1} parent=1 // pred_region
      _
    $region29: #{rnn_classifier_forward.1} parent=1 // pred_fallthru
      _
    // Predicated region
    $region30: #{rnn_classifier_forward.1} parent=1 // pred_check
      _
    $region31: #{rnn_classifier_forward.1} parent=1 // pred_check_branch
      %77 = sbr.rel (0) target = $region33
    $region32: #{rnn_classifier_forward.1} parent=1 // pred_region
      %78 = dma.done [#allocation5], 32
    $region33: #{rnn_classifier_forward.1} parent=1 // pred_fallthru
      _
    // Predicated region
    $region34: #{rnn_classifier_forward.1} parent=1 // pred_check
      _
    $region35: #{rnn_classifier_forward.1} parent=1 // pred_check_branch
      %80 = sbr.rel (0) target = $region37
    $region36: #{rnn_classifier_forward.1} parent=1 // pred_region
      %81 = dma.done [#allocation4], 2688
    $region37: #{rnn_classifier_forward.1} parent=1 // pred_fallthru
      _
    // Predicated region
    $region38: #{rnn_classifier_forward.1} parent=1 // pred_check
      _
    $region39: #{rnn_classifier_forward.1} parent=1 // pred_check_branch
      %83 = sbr.rel (0) target = $region41
    $region40: #{rnn_classifier_forward.1} parent=1 // pred_region
      %84 = dma.done [#allocation8], 6144
    $region41: #{rnn_classifier_forward.1} parent=1 // pred_fallthru
      _
    // Predicated region
    $region42: #{rnn_classifier_forward.1} parent=1 // pred_check
      _
    $region43: #{rnn_classifier_forward.1} parent=1 // pred_check_branch
      %86 = sbr.rel (0) target = $region45
    $region44: #{rnn_classifier_forward.1} parent=1 // pred_region
      %87 = dma.done [#allocation8], 1024
    $region45: #{rnn_classifier_forward.1} parent=1 // pred_fallthru
      _
    // Predicated region
    $region46: #{rnn_classifier_forward.1} parent=1 // pred_check
      _
    $region47: #{rnn_classifier_forward.1} parent=1 // pred_check_branch
      %89 = sbr.rel (0) target = $region49
    $region48: #{rnn_classifier_forward.1} parent=1 // pred_region
      %90 = dma.done [#allocation11], 2048
    $region49: #{rnn_classifier_forward.1} parent=1 // pred_fallthru
      _
    %91 = sfence
    %93 = vst [vmem:[#allocation2] sm:$0xff] 0.0
    %94 = vst [vmem:[#allocation2 + $0x8] sm:$0xff] 0.0
    %95 = vst [vmem:[#allocation2 + $0x10] sm:$0xff] 0.0
    %96 = vst [vmem:[#allocation2 + $0x18] sm:$0xff] 0.0
    %97 = vst [vmem:[#allocation2 + $0x20] sm:$0xff] 0.0
    %98 = vst [vmem:[#allocation2 + $0x28] sm:$0xff] 0.0
    %99 = vst [vmem:[#allocation2 + $0x30] sm:$0xff] 0.0
    %100 = vst [vmem:[#allocation2 + $0x38] sm:$0xff] 0.0
    %101 = vst [vmem:[#allocation2 + $0x40] sm:$0xff] 0.0
    %102 = vst [vmem:[#allocation2 + $0x48] sm:$0xff] 0.0
    %103 = vst [vmem:[#allocation2 + $0x50] sm:$0xff] 0.0
    %104 = vst [vmem:[#allocation2 + $0x58] sm:$0xff] 0.0
    %105 = vst [vmem:[#allocation2 + $0x60] sm:$0xff] 0.0
    %106 = vst [vmem:[#allocation2 + $0x68] sm:$0xff] 0.0
    %107 = vst [vmem:[#allocation2 + $0x70] sm:$0xff] 0.0
    %108 = vst [vmem:[#allocation2 + $0x78] sm:$0xff] 0.0
    %109 = vst [vmem:[#allocation2 + $0x80] sm:$0xff] 0.0
    %110 = vst [vmem:[#allocation2 + $0x88] sm:$0xff] 0.0
    %111 = vst [vmem:[#allocation2 + $0x90] sm:$0xff] 0.0
    %112 = vst [vmem:[#allocation2 + $0x98] sm:$0xff] 0.0
    %113 = vst [vmem:[#allocation2 + $0xa0] sm:$0xff] 0.0
    %114 = vst [vmem:[#allocation2 + $0xa8] sm:$0xff] 0.0
    %115 = vst [vmem:[#allocation2 + $0xb0] sm:$0xff] 0.0
    %116 = vst [vmem:[#allocation2 + $0xb8] sm:$0xff] 0.0
    %s117 = sld [smem:[#allocation3]]
    %s118 = sshra.s32 %s117, 3
    %s119 = sand.u32 %s117, 7
    %s120 = sshra.s32 %s117, 3
    %s121 = sand.u32 %s117, 7
    %s122 = smul.u32 %s118, 3
    %s123 = smul.u32 %s122, 8
    %s124 = sadd.s32 %s123, %s121
    %s125 = scalar_lea.vmem [#allocation6], %s124
    %v126 = vld [vmem:[%s125] ss:$8 sm:$0x7]
    %v127 = vlaneseq
    %vm128 = vcmp.ge.s32.totalorder %v127, 0
    %vm129 = vcmp.lt.s32.totalorder %v127, 384
    %vm130 = vmand %vm128, %vm129
    %131 = vst.msk [vmem:[#allocation2] ss:$8 sm:$0x7] %vm130, %v126
    %132 = vst.msk [vmem:[#allocation2] ss:$8 sm:$0x0] %vm130, %v126
    %s133 = sld [smem:[#allocation3 + $0x80]]
    %s134 = sshra.s32 %s133, 3
    %s135 = sand.u32 %s133, 7
    %s136 = sshra.s32 %s133, 3
    %s137 = sand.u32 %s133, 7
    %s138 = smul.u32 %s134, 3
    %s139 = smul.u32 %s138, 8
    %s140 = sadd.s32 %s139, %s137
    %s141 = scalar_lea.vmem [#allocation6], %s140
    %v142 = vld [vmem:[%s141] ss:$8 sm:$0x7]
    %s143 = scalar_lea.vmem [#allocation2], 1
    %144 = vst.msk [vmem:[%s143] ss:$8 sm:$0x7] %vm130, %v142
    %145 = vst.msk [vmem:[%s143] ss:$8 sm:$0x0] %vm130, %v142
    %s146 = sld [smem:[#allocation3 + $0x1]]
    %s147 = sshra.s32 %s146, 3
    %s148 = sand.u32 %s146, 7
    %s149 = sshra.s32 %s146, 3
    %s150 = sand.u32 %s146, 7
    %s151 = smul.u32 %s147, 3
    %s152 = smul.u32 %s151, 8
    %s153 = sadd.s32 %s152, %s150
    %s154 = scalar_lea.vmem [#allocation6], %s153
    %v155 = vld [vmem:[%s154] ss:$8 sm:$0x7]
    %s156 = scalar_lea.vmem [#allocation2], 24
    %157 = vst.msk [vmem:[%s156] ss:$8 sm:$0x7] %vm130, %v155
    %158 = vst.msk [vmem:[%s156] ss:$8 sm:$0x0] %vm130, %v155
    %s159 = sld [smem:[#allocation3 + $0x81]]
    %s160 = sshra.s32 %s159, 3
    %s161 = sand.u32 %s159, 7
    %s162 = sshra.s32 %s159, 3
    %s163 = sand.u32 %s159, 7
    %s164 = smul.u32 %s160, 3
    %s165 = smul.u32 %s164, 8
    %s166 = sadd.s32 %s165, %s163
    %s167 = scalar_lea.vmem [#allocation6], %s166
    %v168 = vld [vmem:[%s167] ss:$8 sm:$0x7]
    %s169 = scalar_lea.vmem [#allocation2], 25
    %170 = vst.msk [vmem:[%s169] ss:$8 sm:$0x7] %vm130, %v168
    %171 = vst.msk [vmem:[%s169] ss:$8 sm:$0x0] %vm130, %v168
    %s172 = sld [smem:[#allocation3 + $0x2]]
    %s173 = sshra.s32 %s172, 3
    %s174 = sand.u32 %s172, 7
    %s175 = sshra.s32 %s172, 3
    %s176 = sand.u32 %s172, 7
    %s177 = smul.u32 %s173, 3
    %s178 = smul.u32 %s177, 8
    %s179 = sadd.s32 %s178, %s176
    %s180 = scalar_lea.vmem [#allocation6], %s179
    %v181 = vld [vmem:[%s180] ss:$8 sm:$0x7]
    %s182 = scalar_lea.vmem [#allocation2], 48
    %183 = vst.msk [vmem:[%s182] ss:$8 sm:$0x7] %vm130, %v181
    %184 = vst.msk [vmem:[%s182] ss:$8 sm:$0x0] %vm130, %v181
    %s185 = sld [smem:[#allocation3 + $0x82]]
    %s186 = sshra.s32 %s185, 3
    %s187 = sand.u32 %s185, 7
    %s188 = sshra.s32 %s185, 3
    %s189 = sand.u32 %s185, 7
    %s190 = smul.u32 %s186, 3
    %s191 = smul.u32 %s190, 8
    %s192 = sadd.s32 %s191, %s189
    %s193 = scalar_lea.vmem [#allocation6], %s192
    %v194 = vld [vmem:[%s193] ss:$8 sm:$0x7]
    %s195 = scalar_lea.vmem [#allocation2], 49
    %196 = vst.msk [vmem:[%s195] ss:$8 sm:$0x7] %vm130, %v194
    %197 = vst.msk [vmem:[%s195] ss:$8 sm:$0x0] %vm130, %v194
    %s198 = sld [smem:[#allocation3 + $0x3]]
    %s199 = sshra.s32 %s198, 3
    %s200 = sand.u32 %s198, 7
    %s201 = sshra.s32 %s198, 3
    %s202 = sand.u32 %s198, 7
    %s203 = smul.u32 %s199, 3
    %s204 = smul.u32 %s203, 8
    %s205 = sadd.s32 %s204, %s202
    %s206 = scalar_lea.vmem [#allocation6], %s205
    %v207 = vld [vmem:[%s206] ss:$8 sm:$0x7]
    %s208 = scalar_lea.vmem [#allocation2], 72
    %209 = vst.msk [vmem:[%s208] ss:$8 sm:$0x7] %vm130, %v207
    %210 = vst.msk [vmem:[%s208] ss:$8 sm:$0x0] %vm130, %v207
    %s211 = sld [smem:[#allocation3 + $0x83]]
    %s212 = sshra.s32 %s211, 3
    %s213 = sand.u32 %s211, 7
    %s214 = sshra.s32 %s211, 3
    %s215 = sand.u32 %s211, 7
    %s216 = smul.u32 %s212, 3
    %s217 = smul.u32 %s216, 8
    %s218 = sadd.s32 %s217, %s215
    %s219 = scalar_lea.vmem [#allocation6], %s218
    %v220 = vld [vmem:[%s219] ss:$8 sm:$0x7]
    %s221 = scalar_lea.vmem [#allocation2], 73
    %222 = vst.msk [vmem:[%s221] ss:$8 sm:$0x7] %vm130, %v220
    %223 = vst.msk [vmem:[%s221] ss:$8 sm:$0x0] %vm130, %v220
    %s224 = sld [smem:[#allocation3 + $0x4]]
    %s225 = sshra.s32 %s224, 3
    %s226 = sand.u32 %s224, 7
    %s227 = sshra.s32 %s224, 3
    %s228 = sand.u32 %s224, 7
    %s229 = smul.u32 %s225, 3
    %s230 = smul.u32 %s229, 8
    %s231 = sadd.s32 %s230, %s228
    %s232 = scalar_lea.vmem [#allocation6], %s231
    %v233 = vld [vmem:[%s232] ss:$8 sm:$0x7]
    %s234 = scalar_lea.vmem [#allocation2], 96
    %235 = vst.msk [vmem:[%s234] ss:$8 sm:$0x7] %vm130, %v233
    %236 = vst.msk [vmem:[%s234] ss:$8 sm:$0x0] %vm130, %v233
    %s237 = sld [smem:[#allocation3 + $0x84]]
    %s238 = sshra.s32 %s237, 3
    %s239 = sand.u32 %s237, 7
    %s240 = sshra.s32 %s237, 3
    %s241 = sand.u32 %s237, 7
    %s242 = smul.u32 %s238, 3
    %s243 = smul.u32 %s242, 8
    %s244 = sadd.s32 %s243, %s241
    %s245 = scalar_lea.vmem [#allocation6], %s244
    %v246 = vld [vmem:[%s245] ss:$8 sm:$0x7]
    %s247 = scalar_lea.vmem [#allocation2], 97
    %248 = vst.msk [vmem:[%s247] ss:$8 sm:$0x7] %vm130, %v246
    %249 = vst.msk [vmem:[%s247] ss:$8 sm:$0x0] %vm130, %v246
    %s250 = sld [smem:[#allocation3 + $0x5]]
    %s251 = sshra.s32 %s250, 3
    %s252 = sand.u32 %s250, 7
    %s253 = sshra.s32 %s250, 3
    %s254 = sand.u32 %s250, 7
    %s255 = smul.u32 %s251, 3
    %s256 = smul.u32 %s255, 8
    %s257 = sadd.s32 %s256, %s254
    %s258 = scalar_lea.vmem [#allocation6], %s257
    %v259 = vld [vmem:[%s258] ss:$8 sm:$0x7]
    %s260 = scalar_lea.vmem [#allocation2], 120
    %261 = vst.msk [vmem:[%s260] ss:$8 sm:$0x7] %vm130, %v259
    %262 = vst.msk [vmem:[%s260] ss:$8 sm:$0x0] %vm130, %v259
    %s263 = sld [smem:[#allocation3 + $0x85]]
    %s264 = sshra.s32 %s263, 3
    %s265 = sand.u32 %s263, 7
    %s266 = sshra.s32 %s263, 3
    %s267 = sand.u32 %s263, 7
    %s268 = smul.u32 %s264, 3
    %s269 = smul.u32 %s268, 8
    %s270 = sadd.s32 %s269, %s267
    %s271 = scalar_lea.vmem [#allocation6], %s270
    %v272 = vld [vmem:[%s271] ss:$8 sm:$0x7]
    %s273 = scalar_lea.vmem [#allocation2], 121
    %274 = vst.msk [vmem:[%s273] ss:$8 sm:$0x7] %vm130, %v272
    %275 = vst.msk [vmem:[%s273] ss:$8 sm:$0x0] %vm130, %v272
    %s276 = sld [smem:[#allocation3 + $0x6]]
    %s277 = sshra.s32 %s276, 3
    %s278 = sand.u32 %s276, 7
    %s279 = sshra.s32 %s276, 3
    %s280 = sand.u32 %s276, 7
    %s281 = smul.u32 %s277, 3
    %s282 = smul.u32 %s281, 8
    %s283 = sadd.s32 %s282, %s280
    %s284 = scalar_lea.vmem [#allocation6], %s283
    %v285 = vld [vmem:[%s284] ss:$8 sm:$0x7]
    %s286 = scalar_lea.vmem [#allocation2], 144
    %287 = vst.msk [vmem:[%s286] ss:$8 sm:$0x7] %vm130, %v285
    %288 = vst.msk [vmem:[%s286] ss:$8 sm:$0x0] %vm130, %v285
    %s289 = sld [smem:[#allocation3 + $0x86]]
    %s290 = sshra.s32 %s289, 3
    %s291 = sand.u32 %s289, 7
    %s292 = sshra.s32 %s289, 3
    %s293 = sand.u32 %s289, 7
    %s294 = smul.u32 %s290, 3
    %s295 = smul.u32 %s294, 8
    %s296 = sadd.s32 %s295, %s293
    %s297 = scalar_lea.vmem [#allocation6], %s296
    %v298 = vld [vmem:[%s297] ss:$8 sm:$0x7]
    %s299 = scalar_lea.vmem [#allocation2], 145
    %300 = vst.msk [vmem:[%s299] ss:$8 sm:$0x7] %vm130, %v298
    %301 = vst.msk [vmem:[%s299] ss:$8 sm:$0x0] %vm130, %v298
    %s302 = sld [smem:[#allocation3 + $0x7]]
    %s303 = sshra.s32 %s302, 3
    %s304 = sand.u32 %s302, 7
    %s305 = sshra.s32 %s302, 3
    %s306 = sand.u32 %s302, 7
    %s307 = smul.u32 %s303, 3
    %s308 = smul.u32 %s307, 8
    %s309 = sadd.s32 %s308, %s306
    %s310 = scalar_lea.vmem [#allocation6], %s309
    %v311 = vld [vmem:[%s310] ss:$8 sm:$0x7]
    %s312 = scalar_lea.vmem [#allocation2], 168
    %313 = vst.msk [vmem:[%s312] ss:$8 sm:$0x7] %vm130, %v311
    %314 = vst.msk [vmem:[%s312] ss:$8 sm:$0x0] %vm130, %v311
    %s315 = sld [smem:[#allocation3 + $0x87]]
    %s316 = sshra.s32 %s315, 3
    %s317 = sand.u32 %s315, 7
    %s318 = sshra.s32 %s315, 3
    %s319 = sand.u32 %s315, 7
    %s320 = smul.u32 %s316, 3
    %s321 = smul.u32 %s320, 8
    %s322 = sadd.s32 %s321, %s319
    %s323 = scalar_lea.vmem [#allocation6], %s322
    %v324 = vld [vmem:[%s323] ss:$8 sm:$0x7]
    %s325 = scalar_lea.vmem [#allocation2], 169
    %326 = vst.msk [vmem:[%s325] ss:$8 sm:$0x7] %vm130, %v324
    %327 = vst.msk [vmem:[%s325] ss:$8 sm:$0x0] %vm130, %v324
    %v328 = vld [vmem:[#allocation2] sm:$0xff]
    %v329 = vld [vmem:[#allocation2 + $0x8] sm:$0xff]
    %v330 = vld [vmem:[#allocation2 + $0x10] sm:$0xff]
    %v331 = vld [vmem:[#allocation2 + $0x18] sm:$0xff]
    %v332 = vld [vmem:[#allocation2 + $0x20] sm:$0xff]
    %v333 = vld [vmem:[#allocation2 + $0x28] sm:$0xff]
    %v334 = vld [vmem:[#allocation2 + $0x30] sm:$0xff]
    %v335 = vld [vmem:[#allocation2 + $0x38] sm:$0xff]
    %v336 = vld [vmem:[#allocation2 + $0x40] sm:$0xff]
    %v337 = vld [vmem:[#allocation2 + $0x48] sm:$0xff]
    %v338 = vld [vmem:[#allocation2 + $0x50] sm:$0xff]
    %v339 = vld [vmem:[#allocation2 + $0x58] sm:$0xff]
    %v340 = vld [vmem:[#allocation2 + $0x60] sm:$0xff]
    %v341 = vld [vmem:[#allocation2 + $0x68] sm:$0xff]
    %v342 = vld [vmem:[#allocation2 + $0x70] sm:$0xff]
    %v343 = vld [vmem:[#allocation2 + $0x78] sm:$0xff]
    %v344 = vld [vmem:[#allocation2 + $0x80] sm:$0xff]
    %v345 = vld [vmem:[#allocation2 + $0x88] sm:$0xff]
    %v346 = vld [vmem:[#allocation2 + $0x90] sm:$0xff]
    %v347 = vld [vmem:[#allocation2 + $0x98] sm:$0xff]
    %v348 = vld [vmem:[#allocation2 + $0xa0] sm:$0xff]
    %v349 = vld [vmem:[#allocation2 + $0xa8] sm:$0xff]
    %v350 = vld [vmem:[#allocation2 + $0xb0] sm:$0xff]
    %v351 = vld [vmem:[#allocation2 + $0xb8] sm:$0xff]
    %v352 = vld [vmem:[#allocation7] sm:$0xff]
    %v353 = vld [vmem:[#allocation7 + $0x8] sm:$0xff]
    %v354 = vld [vmem:[#allocation7 + $0x10] sm:$0xff]
    %v355 = vld [vmem:[#allocation7 + $0x18] sm:$0xff]
    %v356 = vld [vmem:[#allocation7 + $0x20] sm:$0xff]
    %v357 = vld [vmem:[#allocation7 + $0x28] sm:$0xff]
    %v358 = vld [vmem:[#allocation7 + $0x30] sm:$0xff]
    %v359 = vld [vmem:[#allocation7 + $0x38] sm:$0xff]
    %v360 = vld [vmem:[#allocation7 + $0x40] sm:$0xff]
    %v361 = vld [vmem:[#allocation7 + $0x48] sm:$0xff]
    %v362 = vld [vmem:[#allocation7 + $0x50] sm:$0xff]
    %v363 = vld [vmem:[#allocation7 + $0x58] sm:$0xff]
    %v364 = vld [vmem:[#allocation7 + $0x60] sm:$0xff]
    %v365 = vld [vmem:[#allocation7 + $0x68] sm:$0xff]
    %v366 = vld [vmem:[#allocation7 + $0x70] sm:$0xff]
    %v367 = vld [vmem:[#allocation7 + $0x78] sm:$0xff]
    %v368 = vld [vmem:[#allocation7 + $0x80] sm:$0xff]
    %v369 = vld [vmem:[#allocation7 + $0x88] sm:$0xff]
    %v370 = vld [vmem:[#allocation7 + $0x90] sm:$0xff]
    %v371 = vld [vmem:[#allocation7 + $0x98] sm:$0xff]
    %v372 = vld [vmem:[#allocation7 + $0xa0] sm:$0xff]
    %v373 = vld [vmem:[#allocation7 + $0xa8] sm:$0xff]
    %v374 = vld [vmem:[#allocation7 + $0xb0] sm:$0xff]
    %v375 = vld [vmem:[#allocation7 + $0xb8] sm:$0xff]
    %v376 = vld [vmem:[#allocation7 + $0xc0] sm:$0xff]
    %v377 = vld [vmem:[#allocation7 + $0xc8] sm:$0xff]
    %v378 = vld [vmem:[#allocation7 + $0xd0] sm:$0xff]
    %v379 = vld [vmem:[#allocation7 + $0xd8] sm:$0xff]
    %v380 = vld [vmem:[#allocation7 + $0xe0] sm:$0xff]
    %v381 = vld [vmem:[#allocation7 + $0xe8] sm:$0xff]
    %v382 = vld [vmem:[#allocation7 + $0xf0] sm:$0xff]
    %v383 = vld [vmem:[#allocation7 + $0xf8] sm:$0xff]
    %v384 = vld [vmem:[#allocation7 + $0x100] sm:$0xff]
    %v385 = vld [vmem:[#allocation7 + $0x108] sm:$0xff]
    %v386 = vld [vmem:[#allocation7 + $0x110] sm:$0xff]
    %v387 = vld [vmem:[#allocation7 + $0x118] sm:$0xff]
    %v388 = vld [vmem:[#allocation7 + $0x120] sm:$0xff]
    %v389 = vld [vmem:[#allocation7 + $0x128] sm:$0xff]
    %v390 = vld [vmem:[#allocation7 + $0x130] sm:$0xff]
    %v391 = vld [vmem:[#allocation7 + $0x138] sm:$0xff]
    %v392 = vld [vmem:[#allocation7 + $0x140] sm:$0xff]
    %v393 = vld [vmem:[#allocation7 + $0x148] sm:$0xff]
    %v394 = vld [vmem:[#allocation7 + $0x150] sm:$0xff]
    %v395 = vld [vmem:[#allocation7 + $0x158] sm:$0xff]
    %v396 = vld [vmem:[#allocation7 + $0x160] sm:$0xff]
    %v397 = vld [vmem:[#allocation7 + $0x168] sm:$0xff]
    %v398 = vld [vmem:[#allocation7 + $0x170] sm:$0xff]
    %v399 = vld [vmem:[#allocation7 + $0x178] sm:$0xff]
    %v400 = vld [vmem:[%s3] sm:$0x1]
    %v402 = vlaneseq
    %v403 = vshrl.u32 %v402, 7
    %v404 = vsub.s32 0, %v403
    %v405 = vrot.slane %v400, %v404
    %407 = vmatprep.subr.mxu0 0.0
    %408 = vmatpush1.msra.mxu0 %v352
    %409 = vmatprep.subr.mxu0 0.0
    %410 = vmatpush1.msra.mxu0 %v353
    %411 = vmatprep.subr.mxu0 0.0
    %412 = vmatpush1.msra.mxu0 %v354
    %413 = vmatprep.subr.mxu0 0.0
    %414 = vmatpush1.msra.mxu0 %v355
    %415 = vmatprep.subr.mxu0 0.0
    %416 = vmatpush1.msra.mxu0 %v356
    %417 = vmatprep.subr.mxu0 0.0
    %418 = vmatpush1.msra.mxu0 %v357
    %419 = vmatprep.subr.mxu0 0.0
    %420 = vmatpush1.msra.mxu0 %v358
    %421 = vmatprep.subr.mxu0 0.0
    %422 = vmatpush1.msra.mxu0 %v359
    %423 = vmatprep.subr.mxu0 0.0
    %424 = vmatpush1.msra.mxu0 %v360
    %425 = vmatprep.subr.mxu0 0.0
    %426 = vmatpush1.msra.mxu0 %v361
    %427 = vmatprep.subr.mxu0 0.0
    %428 = vmatpush1.msra.mxu0 %v362
    %429 = vmatprep.subr.mxu0 0.0
    %430 = vmatpush1.msra.mxu0 %v363
    %431 = vmatprep.subr.mxu0 0.0
    %432 = vmatpush1.msra.mxu0 %v364
    %433 = vmatprep.subr.mxu0 0.0
    %434 = vmatpush1.msra.mxu0 %v365
    %435 = vmatprep.subr.mxu0 0.0
    %436 = vmatpush1.msra.mxu0 %v366
    %437 = vmatprep.subr.mxu0 0.0
    %438 = vmatpush1.msra.mxu0 %v367
    %439 = vmatprep.subr.mxu0 0.0
    %440 = vmatpush1.msra.mxu0 %v368
    %441 = vmatprep.subr.mxu0 0.0
    %442 = vmatpush1.msra.mxu0 %v369
    %443 = vmatprep.subr.mxu0 0.0
    %444 = vmatpush1.msra.mxu0 %v370
    %445 = vmatprep.subr.mxu0 0.0
    %446 = vmatpush1.msra.mxu0 %v371
    %447 = vmatprep.subr.mxu0 0.0
    %448 = vmatpush1.msra.mxu0 %v372
    %449 = vmatprep.subr.mxu0 0.0
    %450 = vmatpush1.msra.mxu0 %v373
    %451 = vmatprep.subr.mxu0 0.0
    %452 = vmatpush1.msra.mxu0 %v374
    %453 = vmatprep.subr.mxu0 0.0
    %454 = vmatpush1.msra.mxu0 %v375
    %455 = vmatprep.subr.mxu0 0.0
    %456 = vmatpush1.msra.mxu0 %v376
    %457 = vmatprep.subr.mxu0 0.0
    %458 = vmatpush1.msra.mxu0 %v377
    %459 = vmatprep.subr.mxu0 0.0
    %460 = vmatpush1.msra.mxu0 %v378
    %461 = vmatprep.subr.mxu0 0.0
    %462 = vmatpush1.msra.mxu0 %v379
    %463 = vmatprep.subr.mxu0 0.0
    %464 = vmatpush1.msra.mxu0 %v380
    %465 = vmatprep.subr.mxu0 0.0
    %466 = vmatpush1.msra.mxu0 %v381
    %467 = vmatprep.subr.mxu0 0.0
    %468 = vmatpush1.msra.mxu0 %v382
    %469 = vmatprep.subr.mxu0 0.0
    %470 = vmatpush1.msra.mxu0 %v383
    %471 = vmatprep.mubr.f32.mxu0 %v329
    %472 = vmatmul.mubr.f32.gmra.mrb[0].mxu0 %v328
    %v473 = vpop.f32.mrb[0].mxu0
    %v474 = vadd.f32 %v405, %v473
    %v475 = vpop.f32.mrb[0].mxu0
    %476 = vmatprep.mubr.f32.mxu0 %v332
    %477 = vmatmul.mubr.f32.gmra.mrb[0].mxu0 %v331
    %v478 = vpop.f32.mrb[0].mxu0
    %v479 = vadd.f32 %v405, %v478
    %v480 = vpop.f32.mrb[0].mxu0
    %481 = vmatprep.mubr.f32.mxu0 %v335
    %482 = vmatmul.mubr.f32.gmra.mrb[0].mxu0 %v334
    %v483 = vpop.f32.mrb[0].mxu0
    %v484 = vadd.f32 %v405, %v483
    %v485 = vpop.f32.mrb[0].mxu0
    %486 = vmatprep.mubr.f32.mxu0 %v338
    %487 = vmatmul.mubr.f32.gmra.mrb[0].mxu0 %v337
    %v488 = vpop.f32.mrb[0].mxu0
    %v489 = vadd.f32 %v405, %v488
    %v490 = vpop.f32.mrb[0].mxu0
    %491 = vmatprep.mubr.f32.mxu0 %v341
    %492 = vmatmul.mubr.f32.gmra.mrb[0].mxu0 %v340
    %v493 = vpop.f32.mrb[0].mxu0
    %v494 = vadd.f32 %v405, %v493
    %v495 = vpop.f32.mrb[0].mxu0
    %496 = vmatprep.mubr.f32.mxu0 %v344
    %497 = vmatmul.mubr.f32.gmra.mrb[0].mxu0 %v343
    %v498 = vpop.f32.mrb[0].mxu0
    %v499 = vadd.f32 %v405, %v498
    %v500 = vpop.f32.mrb[0].mxu0
    %501 = vmatprep.mubr.f32.mxu0 %v347
    %502 = vmatmul.mubr.f32.gmra.mrb[0].mxu0 %v346
    %v503 = vpop.f32.mrb[0].mxu0
    %v504 = vadd.f32 %v405, %v503
    %v505 = vpop.f32.mrb[0].mxu0
    %506 = vmatprep.mubr.f32.mxu0 %v350
    %507 = vmatmul.mubr.f32.gmra.mrb[0].mxu0 %v349
    %v508 = vpop.f32.mrb[0].mxu0
    %v509 = vadd.f32 %v405, %v508
    %v510 = vpop.f32.mrb[0].mxu0
    %511 = vdwg.mxu0
    %512 = vmatprep.subr.mxu0 0.0
    %513 = vmatpush1.msra.mxu0 %v384
    %514 = vmatprep.subr.mxu0 0.0
    %515 = vmatpush1.msra.mxu0 %v385
    %516 = vmatprep.subr.mxu0 0.0
    %517 = vmatpush1.msra.mxu0 %v386
    %518 = vmatprep.subr.mxu0 0.0
    %519 = vmatpush1.msra.mxu0 %v387
    %520 = vmatprep.subr.mxu0 0.0
    %521 = vmatpush1.msra.mxu0 %v388
    %522 = vmatprep.subr.mxu0 0.0
    %523 = vmatpush1.msra.mxu0 %v389
    %524 = vmatprep.subr.mxu0 0.0
    %525 = vmatpush1.msra.mxu0 %v390
    %526 = vmatprep.subr.mxu0 0.0
    %527 = vmatpush1.msra.mxu0 %v391
    %528 = vmatprep.subr.mxu0 0.0
    %529 = vmatpush1.msra.mxu0 %v392
    %530 = vmatprep.subr.mxu0 0.0
    %531 = vmatpush1.msra.mxu0 %v393
    %532 = vmatprep.subr.mxu0 0.0
    %533 = vmatpush1.msra.mxu0 %v394
    %534 = vmatprep.subr.mxu0 0.0
    %535 = vmatpush1.msra.mxu0 %v395
    %536 = vmatprep.subr.mxu0 0.0
    %537 = vmatpush1.msra.mxu0 %v396
    %538 = vmatprep.subr.mxu0 0.0
    %539 = vmatpush1.msra.mxu0 %v397
    %540 = vmatprep.subr.mxu0 0.0
    %541 = vmatpush1.msra.mxu0 %v398
    %542 = vmatprep.subr.mxu0 0.0
    %543 = vmatpush1.msra.mxu0 %v399
    %544 = vmatprep.subr.mxu0 0.0
    %545 = vmatpush1.msra.mxu0 0.0
    %546 = vmatprep.subr.mxu0 0.0
    %547 = vmatpush1.msra.mxu0 0.0
    %548 = vmatprep.subr.mxu0 0.0
    %549 = vmatpush1.msra.mxu0 0.0
    %550 = vmatprep.subr.mxu0 0.0
    %551 = vmatpush1.msra.mxu0 0.0
    %552 = vmatprep.subr.mxu0 0.0
    %553 = vmatpush1.msra.mxu0 0.0
    %554 = vmatprep.subr.mxu0 0.0
    %555 = vmatpush1.msra.mxu0 0.0
    %556 = vmatprep.subr.mxu0 0.0
    %557 = vmatpush1.msra.mxu0 0.0
    %558 = vmatprep.subr.mxu0 0.0
    %559 = vmatpush1.msra.mxu0 0.0
    %560 = vmatprep.subr.mxu0 0.0
    %561 = vmatpush1.msra.mxu0 0.0
    %562 = vmatprep.subr.mxu0 0.0
    %563 = vmatpush1.msra.mxu0 0.0
    %564 = vmatprep.subr.mxu0 0.0
    %565 = vmatpush1.msra.mxu0 0.0
    %566 = vmatprep.subr.mxu0 0.0
    %567 = vmatpush1.msra.mxu0 0.0
    %568 = vmatprep.subr.mxu0 0.0
    %569 = vmatpush1.msra.mxu0 0.0
    %570 = vmatprep.subr.mxu0 0.0
    %571 = vmatpush1.msra.mxu0 0.0
    %572 = vmatprep.subr.mxu0 0.0
    %573 = vmatpush1.msra.mxu0 0.0
    %574 = vmatprep.subr.mxu0 0.0
    %575 = vmatpush1.msra.mxu0 0.0
    %576 = vmatprep.mubr.f32.mxu0 0.0
    %577 = vmatmul.mubr.f32.gmra.mrb[0].mxu0 %v330
    %v578 = vpop.f32.mrb[0].mxu0
    %v579 = vadd.f32 %v474, %v578
    %v580 = vpop.f32.mrb[0].mxu0
    %581 = vmatprep.mubr.f32.mxu0 0.0
    %582 = vmatmul.mubr.f32.gmra.mrb[0].mxu0 %v333
    %v583 = vpop.f32.mrb[0].mxu0
    %v584 = vadd.f32 %v479, %v583
    %v585 = vpop.f32.mrb[0].mxu0
    %586 = vmatprep.mubr.f32.mxu0 0.0
    %587 = vmatmul.mubr.f32.gmra.mrb[0].mxu0 %v336
    %v588 = vpop.f32.mrb[0].mxu0
    %v589 = vadd.f32 %v484, %v588
    %v590 = vpop.f32.mrb[0].mxu0
    %591 = vmatprep.mubr.f32.mxu0 0.0
    %592 = vmatmul.mubr.f32.gmra.mrb[0].mxu0 %v339
    %v593 = vpop.f32.mrb[0].mxu0
    %v594 = vadd.f32 %v489, %v593
    %v595 = vpop.f32.mrb[0].mxu0
    %596 = vmatprep.mubr.f32.mxu0 0.0
    %597 = vmatmul.mubr.f32.gmra.mrb[0].mxu0 %v342
    %v598 = vpop.f32.mrb[0].mxu0
    %v599 = vadd.f32 %v494, %v598
    %v600 = vpop.f32.mrb[0].mxu0
    %601 = vmatprep.mubr.f32.mxu0 0.0
    %602 = vmatmul.mubr.f32.gmra.mrb[0].mxu0 %v345
    %v603 = vpop.f32.mrb[0].mxu0
    %v604 = vadd.f32 %v499, %v603
    %v605 = vpop.f32.mrb[0].mxu0
    %606 = vmatprep.mubr.f32.mxu0 0.0
    %607 = vmatmul.mubr.f32.gmra.mrb[0].mxu0 %v348
    %v608 = vpop.f32.mrb[0].mxu0
    %v609 = vadd.f32 %v504, %v608
    %v610 = vpop.f32.mrb[0].mxu0
    %611 = vmatprep.mubr.f32.mxu0 0.0
    %612 = vmatmul.mubr.f32.gmra.mrb[0].mxu0 %v351
    %v613 = vpop.f32.mrb[0].mxu0
    %v614 = vadd.f32 %v509, %v613
    %v615 = vpop.f32.mrb[0].mxu0
    %616 = vdwg.mxu0
    %v617 = vld [vmem:[#allocation9] sm:$0xf]
    %v618 = vld [vmem:[#allocation9 + $0x4] sm:$0xf]
    %v619 = vld [vmem:[#allocation9 + $0x8] sm:$0xf]
    %v620 = vld [vmem:[#allocation9 + $0xc] sm:$0xf]
    %v621 = vld [vmem:[#allocation9 + $0x10] sm:$0xf]
    %v622 = vld [vmem:[#allocation9 + $0x14] sm:$0xf]
    %v623 = vld [vmem:[#allocation9 + $0x18] sm:$0xf]
    %v624 = vld [vmem:[#allocation9 + $0x1c] sm:$0xf]
    %v625 = vld [vmem:[#allocation9 + $0x20] sm:$0xf]
    %v626 = vld [vmem:[#allocation9 + $0x24] sm:$0xf]
    %v627 = vld [vmem:[#allocation9 + $0x28] sm:$0xf]
    %v628 = vld [vmem:[#allocation9 + $0x2c] sm:$0xf]
    %v629 = vld [vmem:[#allocation9 + $0x30] sm:$0xf]
    %v630 = vld [vmem:[#allocation9 + $0x34] sm:$0xf]
    %v631 = vld [vmem:[#allocation9 + $0x38] sm:$0xf]
    %v632 = vld [vmem:[#allocation9 + $0x3c] sm:$0xf]
    %v633 = vmax.f32 %v579, 0.0
    %v634 = vpack.c.bf16 %v633, %v633
    %v651 = vunpack.c.l.b16 %v617
    %v652 = vunpack.c.l.b16 %v618
    %v653 = vunpack.c.l.b16 %v619
    %v654 = vunpack.c.l.b16 %v620
    %v655 = vunpack.c.l.b16 %v621
    %v656 = vunpack.c.l.b16 %v622
    %v657 = vunpack.c.l.b16 %v623
    %v658 = vunpack.c.l.b16 %v624
    %v659 = vunpack.c.l.b16 %v625
    %v660 = vunpack.c.l.b16 %v626
    %v661 = vunpack.c.l.b16 %v627
    %v662 = vunpack.c.l.b16 %v628
    %v663 = vunpack.c.l.b16 %v629
    %v664 = vunpack.c.l.b16 %v630
    %v665 = vunpack.c.l.b16 %v631
    %v666 = vunpack.c.l.b16 %v632
    %v667 = vpack.c.b16 %v652, %v651
    %v668 = vpack.c.b16 %v654, %v653
    %v669 = vpack.c.b16 %v656, %v655
    %v670 = vpack.c.b16 %v658, %v657
    %v671 = vpack.c.b16 %v660, %v659
    %v672 = vpack.c.b16 %v662, %v661
    %v673 = vpack.c.b16 %v664, %v663
    %v674 = vpack.c.b16 %v666, %v665
    %683 = vmatprep.subr.bf16.mxu0 0
    %684 = vmatpush1.bf16.msra.mxu0 %v667
    %685 = vmatprep.subr.bf16.mxu0 0
    %686 = vmatpush1.bf16.msra.mxu0 %v668
    %687 = vmatprep.subr.bf16.mxu0 0
    %688 = vmatpush1.bf16.msra.mxu0 %v669
    %689 = vmatprep.subr.bf16.mxu0 0
    %690 = vmatpush1.bf16.msra.mxu0 %v670
    %691 = vmatprep.subr.bf16.mxu0 0
    %692 = vmatpush1.bf16.msra.mxu0 %v671
    %693 = vmatprep.subr.bf16.mxu0 0
    %694 = vmatpush1.bf16.msra.mxu0 %v672
    %695 = vmatprep.subr.bf16.mxu0 0
    %696 = vmatpush1.bf16.msra.mxu0 %v673
    %697 = vmatprep.subr.bf16.mxu0 0
    %698 = vmatpush1.bf16.msra.mxu0 %v674
    %699 = vmatprep.subr.bf16.mxu0 0
    %700 = vmatpush1.bf16.msra.mxu0 0
    %701 = vmatprep.subr.bf16.mxu0 0
    %702 = vmatpush1.bf16.msra.mxu0 0
    %703 = vmatprep.subr.bf16.mxu0 0
    %704 = vmatpush1.bf16.msra.mxu0 0
    %705 = vmatprep.subr.bf16.mxu0 0
    %706 = vmatpush1.bf16.msra.mxu0 0
    %707 = vmatprep.subr.bf16.mxu0 0
    %708 = vmatpush1.bf16.msra.mxu0 0
    %709 = vmatprep.subr.bf16.mxu0 0
    %710 = vmatpush1.bf16.msra.mxu0 0
    %711 = vmatprep.subr.bf16.mxu0 0
    %712 = vmatpush1.bf16.msra.mxu0 0
    %713 = vmatprep.subr.bf16.mxu0 0
    %714 = vmatpush1.bf16.msra.mxu0 0
    %715 = vmatprep.mubr.bf16.mxu0 0
    %716 = vmatmul.mubr.bf16.gmra.mrb[0].mxu0 %v634
    %v717 = vpop.f32.mrb[0].mxu0
    %v718 = vadd.f32 0.0, %v717
    %v719 = vpop.f32.mrb[0].mxu0
    %v720 = vpop.f32.mrb[0].mxu0
    %v721 = vpop.f32.mrb[0].mxu0
    %722 = vdwg.mxu0
    %v723 = vadd.f32 %v584, %v718
    %v724 = vmax.f32 %v723, 0.0
    %v725 = vpack.c.bf16 %v724, %v724
    %726 = vmatprep.subr.bf16.mxu0 0
    %727 = vmatpush1.bf16.msra.mxu0 %v667
    %728 = vmatprep.subr.bf16.mxu0 0
    %729 = vmatpush1.bf16.msra.mxu0 %v668
    %730 = vmatprep.subr.bf16.mxu0 0
    %731 = vmatpush1.bf16.msra.mxu0 %v669
    %732 = vmatprep.subr.bf16.mxu0 0
    %733 = vmatpush1.bf16.msra.mxu0 %v670
    %734 = vmatprep.subr.bf16.mxu0 0
    %735 = vmatpush1.bf16.msra.mxu0 %v671
    %736 = vmatprep.subr.bf16.mxu0 0
    %737 = vmatpush1.bf16.msra.mxu0 %v672
    %738 = vmatprep.subr.bf16.mxu0 0
    %739 = vmatpush1.bf16.msra.mxu0 %v673
    %740 = vmatprep.subr.bf16.mxu0 0
    %741 = vmatpush1.bf16.msra.mxu0 %v674
    %742 = vmatprep.subr.bf16.mxu0 0
    %743 = vmatpush1.bf16.msra.mxu0 0
    %744 = vmatprep.subr.bf16.mxu0 0
    %745 = vmatpush1.bf16.msra.mxu0 0
    %746 = vmatprep.subr.bf16.mxu0 0
    %747 = vmatpush1.bf16.msra.mxu0 0
    %748 = vmatprep.subr.bf16.mxu0 0
    %749 = vmatpush1.bf16.msra.mxu0 0
    %750 = vmatprep.subr.bf16.mxu0 0
    %751 = vmatpush1.bf16.msra.mxu0 0
    %752 = vmatprep.subr.bf16.mxu0 0
    %753 = vmatpush1.bf16.msra.mxu0 0
    %754 = vmatprep.subr.bf16.mxu0 0
    %755 = vmatpush1.bf16.msra.mxu0 0
    %756 = vmatprep.subr.bf16.mxu0 0
    %757 = vmatpush1.bf16.msra.mxu0 0
    %758 = vmatprep.mubr.bf16.mxu0 0
    %759 = vmatmul.mubr.bf16.gmra.mrb[0].mxu0 %v725
    %v760 = vpop.f32.mrb[0].mxu0
    %v761 = vadd.f32 0.0, %v760
    %v762 = vpop.f32.mrb[0].mxu0
    %v763 = vpop.f32.mrb[0].mxu0
    %v764 = vpop.f32.mrb[0].mxu0
    %765 = vdwg.mxu0
    %v766 = vadd.f32 %v589, %v761
    %v767 = vmax.f32 %v766, 0.0
    %v768 = vpack.c.bf16 %v767, %v767
    %769 = vmatprep.subr.bf16.mxu0 0
    %770 = vmatpush1.bf16.msra.mxu0 %v667
    %771 = vmatprep.subr.bf16.mxu0 0
    %772 = vmatpush1.bf16.msra.mxu0 %v668
    %773 = vmatprep.subr.bf16.mxu0 0
    %774 = vmatpush1.bf16.msra.mxu0 %v669
    %775 = vmatprep.subr.bf16.mxu0 0
    %776 = vmatpush1.bf16.msra.mxu0 %v670
    %777 = vmatprep.subr.bf16.mxu0 0
    %778 = vmatpush1.bf16.msra.mxu0 %v671
    %779 = vmatprep.subr.bf16.mxu0 0
    %780 = vmatpush1.bf16.msra.mxu0 %v672
    %781 = vmatprep.subr.bf16.mxu0 0
    %782 = vmatpush1.bf16.msra.mxu0 %v673
    %783 = vmatprep.subr.bf16.mxu0 0
    %784 = vmatpush1.bf16.msra.mxu0 %v674
    %785 = vmatprep.subr.bf16.mxu0 0
    %786 = vmatpush1.bf16.msra.mxu0 0
    %787 = vmatprep.subr.bf16.mxu0 0
    %788 = vmatpush1.bf16.msra.mxu0 0
    %789 = vmatprep.subr.bf16.mxu0 0
    %790 = vmatpush1.bf16.msra.mxu0 0
    %791 = vmatprep.subr.bf16.mxu0 0
    %792 = vmatpush1.bf16.msra.mxu0 0
    %793 = vmatprep.subr.bf16.mxu0 0
    %794 = vmatpush1.bf16.msra.mxu0 0
    %795 = vmatprep.subr.bf16.mxu0 0
    %796 = vmatpush1.bf16.msra.mxu0 0
    %797 = vmatprep.subr.bf16.mxu0 0
    %798 = vmatpush1.bf16.msra.mxu0 0
    %799 = vmatprep.subr.bf16.mxu0 0
    %800 = vmatpush1.bf16.msra.mxu0 0
    %801 = vmatprep.mubr.bf16.mxu0 0
    %802 = vmatmul.mubr.bf16.gmra.mrb[0].mxu0 %v768
    %v803 = vpop.f32.mrb[0].mxu0
    %v804 = vadd.f32 0.0, %v803
    %v805 = vpop.f32.mrb[0].mxu0
    %v806 = vpop.f32.mrb[0].mxu0
    %v807 = vpop.f32.mrb[0].mxu0
    %808 = vdwg.mxu0
    %v809 = vadd.f32 %v594, %v804
    %v810 = vmax.f32 %v809, 0.0
    %v811 = vpack.c.bf16 %v810, %v810
    %812 = vmatprep.subr.bf16.mxu0 0
    %813 = vmatpush1.bf16.msra.mxu0 %v667
    %814 = vmatprep.subr.bf16.mxu0 0
    %815 = vmatpush1.bf16.msra.mxu0 %v668
    %816 = vmatprep.subr.bf16.mxu0 0
    %817 = vmatpush1.bf16.msra.mxu0 %v669
    %818 = vmatprep.subr.bf16.mxu0 0
    %819 = vmatpush1.bf16.msra.mxu0 %v670
    %820 = vmatprep.subr.bf16.mxu0 0
    %821 = vmatpush1.bf16.msra.mxu0 %v671
    %822 = vmatprep.subr.bf16.mxu0 0
    %823 = vmatpush1.bf16.msra.mxu0 %v672
    %824 = vmatprep.subr.bf16.mxu0 0
    %825 = vmatpush1.bf16.msra.mxu0 %v673
    %826 = vmatprep.subr.bf16.mxu0 0
    %827 = vmatpush1.bf16.msra.mxu0 %v674
    %828 = vmatprep.subr.bf16.mxu0 0
    %829 = vmatpush1.bf16.msra.mxu0 0
    %830 = vmatprep.subr.bf16.mxu0 0
    %831 = vmatpush1.bf16.msra.mxu0 0
    %832 = vmatprep.subr.bf16.mxu0 0
    %833 = vmatpush1.bf16.msra.mxu0 0
    %834 = vmatprep.subr.bf16.mxu0 0
    %835 = vmatpush1.bf16.msra.mxu0 0
    %836 = vmatprep.subr.bf16.mxu0 0
    %837 = vmatpush1.bf16.msra.mxu0 0
    %838 = vmatprep.subr.bf16.mxu0 0
    %839 = vmatpush1.bf16.msra.mxu0 0
    %840 = vmatprep.subr.bf16.mxu0 0
    %841 = vmatpush1.bf16.msra.mxu0 0
    %842 = vmatprep.subr.bf16.mxu0 0
    %843 = vmatpush1.bf16.msra.mxu0 0
    %844 = vmatprep.mubr.bf16.mxu0 0
    %845 = vmatmul.mubr.bf16.gmra.mrb[0].mxu0 %v811
    %v846 = vpop.f32.mrb[0].mxu0
    %v847 = vadd.f32 0.0, %v846
    %v848 = vpop.f32.mrb[0].mxu0
    %v849 = vpop.f32.mrb[0].mxu0
    %v850 = vpop.f32.mrb[0].mxu0
    %851 = vdwg.mxu0
    %v852 = vadd.f32 %v599, %v847
    %v853 = vmax.f32 %v852, 0.0
    %v854 = vpack.c.bf16 %v853, %v853
    %855 = vmatprep.subr.bf16.mxu0 0
    %856 = vmatpush1.bf16.msra.mxu0 %v667
    %857 = vmatprep.subr.bf16.mxu0 0
    %858 = vmatpush1.bf16.msra.mxu0 %v668
    %859 = vmatprep.subr.bf16.mxu0 0
    %860 = vmatpush1.bf16.msra.mxu0 %v669
    %861 = vmatprep.subr.bf16.mxu0 0
    %862 = vmatpush1.bf16.msra.mxu0 %v670
    %863 = vmatprep.subr.bf16.mxu0 0
    %864 = vmatpush1.bf16.msra.mxu0 %v671
    %865 = vmatprep.subr.bf16.mxu0 0
    %866 = vmatpush1.bf16.msra.mxu0 %v672
    %867 = vmatprep.subr.bf16.mxu0 0
    %868 = vmatpush1.bf16.msra.mxu0 %v673
    %869 = vmatprep.subr.bf16.mxu0 0
    %870 = vmatpush1.bf16.msra.mxu0 %v674
    %871 = vmatprep.subr.bf16.mxu0 0
    %872 = vmatpush1.bf16.msra.mxu0 0
    %873 = vmatprep.subr.bf16.mxu0 0
    %874 = vmatpush1.bf16.msra.mxu0 0
    %875 = vmatprep.subr.bf16.mxu0 0
    %876 = vmatpush1.bf16.msra.mxu0 0
    %877 = vmatprep.subr.bf16.mxu0 0
    %878 = vmatpush1.bf16.msra.mxu0 0
    %879 = vmatprep.subr.bf16.mxu0 0
    %880 = vmatpush1.bf16.msra.mxu0 0
    %881 = vmatprep.subr.bf16.mxu0 0
    %882 = vmatpush1.bf16.msra.mxu0 0
    %883 = vmatprep.subr.bf16.mxu0 0
    %884 = vmatpush1.bf16.msra.mxu0 0
    %885 = vmatprep.subr.bf16.mxu0 0
    %886 = vmatpush1.bf16.msra.mxu0 0
    %887 = vmatprep.mubr.bf16.mxu0 0
    %888 = vmatmul.mubr.bf16.gmra.mrb[0].mxu0 %v854
    %v889 = vpop.f32.mrb[0].mxu0
    %v890 = vadd.f32 0.0, %v889
    %v891 = vpop.f32.mrb[0].mxu0
    %v892 = vpop.f32.mrb[0].mxu0
    %v893 = vpop.f32.mrb[0].mxu0
    %894 = vdwg.mxu0
    %v895 = vadd.f32 %v604, %v890
    %v896 = vmax.f32 %v895, 0.0
    %v897 = vpack.c.bf16 %v896, %v896
    %898 = vmatprep.subr.bf16.mxu0 0
    %899 = vmatpush1.bf16.msra.mxu0 %v667
    %900 = vmatprep.subr.bf16.mxu0 0
    %901 = vmatpush1.bf16.msra.mxu0 %v668
    %902 = vmatprep.subr.bf16.mxu0 0
    %903 = vmatpush1.bf16.msra.mxu0 %v669
    %904 = vmatprep.subr.bf16.mxu0 0
    %905 = vmatpush1.bf16.msra.mxu0 %v670
    %906 = vmatprep.subr.bf16.mxu0 0
    %907 = vmatpush1.bf16.msra.mxu0 %v671
    %908 = vmatprep.subr.bf16.mxu0 0
    %909 = vmatpush1.bf16.msra.mxu0 %v672
    %910 = vmatprep.subr.bf16.mxu0 0
    %911 = vmatpush1.bf16.msra.mxu0 %v673
    %912 = vmatprep.subr.bf16.mxu0 0
    %913 = vmatpush1.bf16.msra.mxu0 %v674
    %914 = vmatprep.subr.bf16.mxu0 0
    %915 = vmatpush1.bf16.msra.mxu0 0
    %916 = vmatprep.subr.bf16.mxu0 0
    %917 = vmatpush1.bf16.msra.mxu0 0
    %918 = vmatprep.subr.bf16.mxu0 0
    %919 = vmatpush1.bf16.msra.mxu0 0
    %920 = vmatprep.subr.bf16.mxu0 0
    %921 = vmatpush1.bf16.msra.mxu0 0
    %922 = vmatprep.subr.bf16.mxu0 0
    %923 = vmatpush1.bf16.msra.mxu0 0
    %924 = vmatprep.subr.bf16.mxu0 0
    %925 = vmatpush1.bf16.msra.mxu0 0
    %926 = vmatprep.subr.bf16.mxu0 0
    %927 = vmatpush1.bf16.msra.mxu0 0
    %928 = vmatprep.subr.bf16.mxu0 0
    %929 = vmatpush1.bf16.msra.mxu0 0
    %930 = vmatprep.mubr.bf16.mxu0 0
    %931 = vmatmul.mubr.bf16.gmra.mrb[0].mxu0 %v897
    %v932 = vpop.f32.mrb[0].mxu0
    %v933 = vadd.f32 0.0, %v932
    %v934 = vpop.f32.mrb[0].mxu0
    %v935 = vpop.f32.mrb[0].mxu0
    %v936 = vpop.f32.mrb[0].mxu0
    %937 = vdwg.mxu0
    %v938 = vadd.f32 %v609, %v933
    %v939 = vmax.f32 %v938, 0.0
    %v940 = vpack.c.bf16 %v939, %v939
    %941 = vmatprep.subr.bf16.mxu0 0
    %942 = vmatpush1.bf16.msra.mxu0 %v667
    %943 = vmatprep.subr.bf16.mxu0 0
    %944 = vmatpush1.bf16.msra.mxu0 %v668
    %945 = vmatprep.subr.bf16.mxu0 0
    %946 = vmatpush1.bf16.msra.mxu0 %v669
    %947 = vmatprep.subr.bf16.mxu0 0
    %948 = vmatpush1.bf16.msra.mxu0 %v670
    %949 = vmatprep.subr.bf16.mxu0 0
    %950 = vmatpush1.bf16.msra.mxu0 %v671
    %951 = vmatprep.subr.bf16.mxu0 0
    %952 = vmatpush1.bf16.msra.mxu0 %v672
    %953 = vmatprep.subr.bf16.mxu0 0
    %954 = vmatpush1.bf16.msra.mxu0 %v673
    %955 = vmatprep.subr.bf16.mxu0 0
    %956 = vmatpush1.bf16.msra.mxu0 %v674
    %957 = vmatprep.subr.bf16.mxu0 0
    %958 = vmatpush1.bf16.msra.mxu0 0
    %959 = vmatprep.subr.bf16.mxu0 0
    %960 = vmatpush1.bf16.msra.mxu0 0
    %961 = vmatprep.subr.bf16.mxu0 0
    %962 = vmatpush1.bf16.msra.mxu0 0
    %963 = vmatprep.subr.bf16.mxu0 0
    %964 = vmatpush1.bf16.msra.mxu0 0
    %965 = vmatprep.subr.bf16.mxu0 0
    %966 = vmatpush1.bf16.msra.mxu0 0
    %967 = vmatprep.subr.bf16.mxu0 0
    %968 = vmatpush1.bf16.msra.mxu0 0
    %969 = vmatprep.subr.bf16.mxu0 0
    %970 = vmatpush1.bf16.msra.mxu0 0
    %971 = vmatprep.subr.bf16.mxu0 0
    %972 = vmatpush1.bf16.msra.mxu0 0
    %973 = vmatprep.mubr.bf16.mxu0 0
    %974 = vmatmul.mubr.bf16.gmra.mrb[0].mxu0 %v940
    %v975 = vpop.f32.mrb[0].mxu0
    %v976 = vadd.f32 0.0, %v975
    %v977 = vpop.f32.mrb[0].mxu0
    %v978 = vpop.f32.mrb[0].mxu0
    %v979 = vpop.f32.mrb[0].mxu0
    %980 = vdwg.mxu0
    %v981 = vadd.f32 %v614, %v976
    %v982 = vmax.f32 %v981, 0.0
    %v983 = vld [vmem:[#allocation10] sm:$0xff]
    %v984 = vld [vmem:[#allocation10 + $0x8] sm:$0xff]
    %v985 = vld [vmem:[#allocation10 + $0x10] sm:$0xff]
    %v986 = vld [vmem:[#allocation10 + $0x18] sm:$0xff]
    %v987 = vld [vmem:[#allocation10 + $0x20] sm:$0xff]
    %v988 = vld [vmem:[#allocation10 + $0x28] sm:$0xff]
    %v989 = vld [vmem:[#allocation10 + $0x30] sm:$0xff]
    %v990 = vld [vmem:[#allocation10 + $0x38] sm:$0xff]
    %v991 = vld [vmem:[#allocation10 + $0x40] sm:$0xff]
    %v992 = vld [vmem:[#allocation10 + $0x48] sm:$0xff]
    %v993 = vld [vmem:[#allocation10 + $0x50] sm:$0xff]
    %v994 = vld [vmem:[#allocation10 + $0x58] sm:$0xff]
    %v995 = vld [vmem:[#allocation10 + $0x60] sm:$0xff]
    %v996 = vld [vmem:[#allocation10 + $0x68] sm:$0xff]
    %v997 = vld [vmem:[#allocation10 + $0x70] sm:$0xff]
    %v998 = vld [vmem:[#allocation10 + $0x78] sm:$0xff]
    %v999 = vld [vmem:[%s6] sm:$0x1]
    %v1001 = vlaneseq
    %v1002 = vshrl.u32 %v1001, 7
    %v1003 = vsub.s32 0, %v1002
    %v1004 = vrot.slane %v999, %v1003
    %1006 = vmatprep.subr.mxu0 0.0
    %1007 = vmatpush1.msra.mxu0 %v983
    %1008 = vmatprep.subr.mxu0 0.0
    %1009 = vmatpush1.msra.mxu0 %v984
    %1010 = vmatprep.subr.mxu0 0.0
    %1011 = vmatpush1.msra.mxu0 %v985
    %1012 = vmatprep.subr.mxu0 0.0
    %1013 = vmatpush1.msra.mxu0 %v986
    %1014 = vmatprep.subr.mxu0 0.0
    %1015 = vmatpush1.msra.mxu0 %v987
    %1016 = vmatprep.subr.mxu0 0.0
    %1017 = vmatpush1.msra.mxu0 %v988
    %1018 = vmatprep.subr.mxu0 0.0
    %1019 = vmatpush1.msra.mxu0 %v989
    %1020 = vmatprep.subr.mxu0 0.0
    %1021 = vmatpush1.msra.mxu0 %v990
    %1022 = vmatprep.subr.mxu0 0.0
    %1023 = vmatpush1.msra.mxu0 %v991
    %1024 = vmatprep.subr.mxu0 0.0
    %1025 = vmatpush1.msra.mxu0 %v992
    %1026 = vmatprep.subr.mxu0 0.0
    %1027 = vmatpush1.msra.mxu0 %v993
    %1028 = vmatprep.subr.mxu0 0.0
    %1029 = vmatpush1.msra.mxu0 %v994
    %1030 = vmatprep.subr.mxu0 0.0
    %1031 = vmatpush1.msra.mxu0 %v995
    %1032 = vmatprep.subr.mxu0 0.0
    %1033 = vmatpush1.msra.mxu0 %v996
    %1034 = vmatprep.subr.mxu0 0.0
    %1035 = vmatpush1.msra.mxu0 %v997
    %1036 = vmatprep.subr.mxu0 0.0
    %1037 = vmatpush1.msra.mxu0 %v998
    %1038 = vmatprep.subr.mxu0 0.0
    %1039 = vmatpush1.msra.mxu0 0.0
    %1040 = vmatprep.subr.mxu0 0.0
    %1041 = vmatpush1.msra.mxu0 0.0
    %1042 = vmatprep.subr.mxu0 0.0
    %1043 = vmatpush1.msra.mxu0 0.0
    %1044 = vmatprep.subr.mxu0 0.0
    %1045 = vmatpush1.msra.mxu0 0.0
    %1046 = vmatprep.subr.mxu0 0.0
    %1047 = vmatpush1.msra.mxu0 0.0
    %1048 = vmatprep.subr.mxu0 0.0
    %1049 = vmatpush1.msra.mxu0 0.0
    %1050 = vmatprep.subr.mxu0 0.0
    %1051 = vmatpush1.msra.mxu0 0.0
    %1052 = vmatprep.subr.mxu0 0.0
    %1053 = vmatpush1.msra.mxu0 0.0
    %1054 = vmatprep.subr.mxu0 0.0
    %1055 = vmatpush1.msra.mxu0 0.0
    %1056 = vmatprep.subr.mxu0 0.0
    %1057 = vmatpush1.msra.mxu0 0.0
    %1058 = vmatprep.subr.mxu0 0.0
    %1059 = vmatpush1.msra.mxu0 0.0
    %1060 = vmatprep.subr.mxu0 0.0
    %1061 = vmatpush1.msra.mxu0 0.0
    %1062 = vmatprep.subr.mxu0 0.0
    %1063 = vmatpush1.msra.mxu0 0.0
    %1064 = vmatprep.subr.mxu0 0.0
    %1065 = vmatpush1.msra.mxu0 0.0
    %1066 = vmatprep.subr.mxu0 0.0
    %1067 = vmatpush1.msra.mxu0 0.0
    %1068 = vmatprep.subr.mxu0 0.0
    %1069 = vmatpush1.msra.mxu0 0.0
    %1070 = vmatprep.mubr.f32.mxu0 0.0
    %1071 = vmatmul.mubr.f32.gmra.mrb[0].mxu0 %v982
    %v1072 = vpop.f32.mrb[0].mxu0
    %v1073 = vadd.f32 %v1004, %v1072
    %v1074 = vpop.f32.mrb[0].mxu0
    %1075 = vdwg.mxu0
    %1076 = vmax.xlane.f32.xlu0 %v1073
    %v1077 = vpop.xlane.xlu0 %1076
    %v1078 = vsub.f32 %v1073, %v1077
    %v1079 = vmul.f32 %v1078, 1.442695
    %v1080 = vpow.pop %v1079
    %1081 = vadd.xlane.f32.xlu0 %v1080
    %v1082 = vpop.xlane.xlu0 %1081
    %v1083 = vlog2.pop %v1082
    %v1084 = vmul.f32 %v1083, 0.6931472
    %v1085 = vsub.f32 %v1078, %v1084
    %1086 = vst [vmem:[%s7] sm:$0xff] %v1085
    // Predicated region
    $region50: #{rnn_classifier_forward.1} parent=1 // pred_check
      _
    $region51: #{rnn_classifier_forward.1} parent=1 // pred_check_branch
      %1088 = sbr.rel (0) target = $region53
    $region52: #{rnn_classifier_forward.1} parent=1 // pred_region
      _
    $region53: #{rnn_classifier_forward.1} parent=1 // pred_fallthru
      _
    // Predicated region
    $region54: #{rnn_classifier_forward.1} parent=1 // pred_check
      _
    $region55: #{rnn_classifier_forward.1} parent=1 // pred_check_branch
      %1090 = sbr.rel (0) target = $region57
    $region56: #{rnn_classifier_forward.1} parent=1 // pred_region
      _
    $region57: #{rnn_classifier_forward.1} parent=1 // pred_fallthru
      _
    %1091 = vsyncpa [#allocation4], 1
    %1092 = vsyncpa [#allocation8], 1
    %1093 = vsyncpa [#allocation11], 1
    %1094 = vsyncpa [#allocation5], 1

</llo_original>
